<compile_context>
chip_gen: v6e
topology: v6e:2x2x1
jax: 0.10.0
libtpu: 0.0.40
codegen_flags: <defaults>
</compile_context>

<pallas_src>
import functools
import math

import jax
import jax.numpy as jnp
from jax import lax
from jax.experimental import pallas as pl
from jax.experimental.pallas import tpu as pltpu


def _attn_kernel(q_ref, k_ref, v_ref, *rest, inv_scale, dropout_p, has_dropout):
    if has_dropout:
        u_ref, o_ref, m_sc, l_sc, acc_sc = rest
    else:
        o_ref, m_sc, l_sc, acc_sc = rest

    ki = pl.program_id(2)

    @pl.when(ki == 0)
    def _init():
        m_sc[...] = jnp.full(m_sc.shape, -jnp.inf, m_sc.dtype)
        l_sc[...] = jnp.zeros(l_sc.shape, l_sc.dtype)
        acc_sc[...] = jnp.zeros(acc_sc.shape, acc_sc.dtype)

    # Fold the 1/sqrt(embed_dim) scale into the (small) q tile, not the (tq, tk) scores.
    q = q_ref[...] * inv_scale                                    # (tq, D)

    # q @ k^T without materializing a transpose of k: contract last dims directly.
    s = lax.dot_general(q, k_ref[...], (((1,), (1,)), ((), ())),
                        preferred_element_type=jnp.float32)       # (tq, tk)

    m_prev = m_sc[...]
    m_new = jnp.maximum(m_prev, jnp.max(s, axis=-1, keepdims=True))
    alpha = jnp.exp(m_prev - m_new)
    e = jnp.exp(s - m_new)                                        # (tq, tk)

    l_sc[...] = alpha * l_sc[...] + jnp.sum(e, axis=-1, keepdims=True)
    m_sc[...] = m_new

    if has_dropout:
        # F.dropout on the softmax output: keep with prob (1-p), scale kept by 1/(1-p).
        # Applying it to the unnormalized exponentials commutes with the final 1/l.
        keep = u_ref[...] >= dropout_p
        e = jnp.where(keep, e * (1.0 / (1.0 - dropout_p)), 0.0)

    acc_sc[...] = alpha * acc_sc[...] + jnp.dot(
        e.astype(v_ref.dtype), v_ref[...], preferred_element_type=jnp.float32)

    @pl.when(ki == pl.num_programs(2) - 1)
    def _finalize():
        # Exact reciprocal: runs once per output tile, off the hot kv loop.
        o_ref[...] = (acc_sc[...] / l_sc[...]).astype(o_ref.dtype)


def scaled_dot_product_attention(q, k, v, *, embed_dim, dropout_p=0.5, key=None,
                                 block_q=128, block_k=128):
    B, Sq, D = q.shape
    _, Sk, _ = k.shape
    assert k.shape == (B, Sk, D) and v.shape == (B, Sk, D)

    dropout_p = float(dropout_p)
    if dropout_p >= 1.0:
        # torch drops everything (scale 1/(1-p) never applied to a kept element).
        return jnp.zeros((B, Sq, D), q.dtype)

    tq = min(block_q, Sq)
    tk = min(block_k, Sk)
    assert Sq % tq == 0 and Sk % tk == 0, "Sq/Sk must be divisible by the tile sizes"

    inv_scale = 1.0 / math.sqrt(float(embed_dim))
    has_dropout = dropout_p > 0.0

    grid = (B, Sq // tq, Sk // tk)
    in_specs = [
        pl.BlockSpec((None, tq, D), lambda b, qi, ki: (b, qi, 0)),
        pl.BlockSpec((None, tk, D), lambda b, qi, ki: (b, ki, 0)),
        pl.BlockSpec((None, tk, D), lambda b, qi, ki: (b, ki, 0)),
    ]
    inputs = [q, k, v]
    bytes_accessed = sum(int(x.size) * x.dtype.itemsize for x in (q, k, v)) \
        + B * Sq * D * q.dtype.itemsize

    if has_dropout:
        if key is None:
            key = jax.random.PRNGKey(0)
        # TODO(synk): generate dropout bits in-kernel with pltpu.prng_random_bits on
        # real TPU (saves B*Sq*Sk HBM traffic); streamed here so interpret mode runs.
        u = jax.random.uniform(key, (B, Sq, Sk), dtype=jnp.float32)
        in_specs.append(pl.BlockSpec((None, tq, tk), lambda b, qi, ki: (b, qi, ki)))
        inputs.append(u)
        bytes_accessed += int(u.size) * u.dtype.itemsize

    kernel = functools.partial(_attn_kernel, inv_scale=inv_scale,
                               dropout_p=dropout_p, has_dropout=has_dropout)

    return pl.pallas_call(
        kernel,
        out_shape=jax.ShapeDtypeStruct((B, Sq, D), q.dtype),
        grid_spec=pltpu.PrefetchScalarGridSpec(
            num_scalar_prefetch=0,
            grid=grid,
            in_specs=in_specs,
            out_specs=pl.BlockSpec((None, tq, D), lambda b, qi, ki: (b, qi, 0)),
            scratch_shapes=[
                pltpu.VMEM((tq, 1), jnp.float32),   # running max  m
                pltpu.VMEM((tq, 1), jnp.float32),   # running sum  l
                pltpu.VMEM((tq, D), jnp.float32),   # output accumulator
            ],
        ),
        compiler_params=pltpu.CompilerParams(
            dimension_semantics=("parallel", "parallel", "arbitrary")),
        cost_estimate=pl.CostEstimate(
            flops=4 * B * Sq * Sk * D,
            transcendentals=B * Sq * Sk,
            bytes_accessed=bytes_accessed),
    )(*inputs)


if __name__ == "__main__":
    # Small but MXU/lane-friendly shapes (lane-dense D=128, 128/256-row tiles).
    B, Sq, Sk, D = 2, 128, 256, 128
    key = jax.random.PRNGKey(0)
    kq, kk, kv, kd = jax.random.split(key, 4)
    q = jax.random.normal(kq, (B, Sq, D), dtype=jnp.float32)
    k = jax.random.normal(kk, (B, Sk, D), dtype=jnp.float32)
    v = jax.random.normal(kv, (B, Sk, D), dtype=jnp.float32)

    # Forward with the module's default dropout_p = 0.5.
    out = scaled_dot_product_attention(q, k, v, embed_dim=D, dropout_p=0.5, key=kd)
    jax.block_until_ready(out)
    assert out.shape == (B, Sq, D) and out.dtype == jnp.float32

    # Pure-JAX reference using the SAME dropout mask (recomputed from the same key).
    s_ref = jnp.einsum("bqd,bkd->bqk", q, k,
                       precision=jax.lax.Precision.HIGHEST) / math.sqrt(float(D))
    p_ref = jax.nn.softmax(s_ref, axis=-1)
    u = jax.random.uniform(kd, (B, Sq, Sk), dtype=jnp.float32)
    p_drop = jnp.where(u >= 0.5, p_ref / 0.5, 0.0)
    ref_drop = jnp.einsum("bqk,bkd->bqd", p_drop, v,
                          precision=jax.lax.Precision.HIGHEST)
    assert jnp.allclose(out, ref_drop, atol=2e-3, rtol=2e-3)

    # Also check the no-dropout path.
    out_nodrop = scaled_dot_product_attention(q, k, v, embed_dim=D, dropout_p=0.0)
    ref = jnp.einsum("bqk,bkd->bqd", p_ref, v, precision=jax.lax.Precision.HIGHEST)
    assert jnp.allclose(out_nodrop, ref, atol=2e-3, rtol=2e-3)

    print("KERNEL_OK")
</pallas_src>

<mosaic_0001>
module attributes {stable_mosaic.version = 11 : i64} {
  func.func @_attn_kernel(%arg0: i32, %arg1: i32, %arg2: i32, %arg3: memref<1x128x128xf32, #tpu.memory_space<vmem>>, %arg4: memref<1x128x128xf32, #tpu.memory_space<vmem>>, %arg5: memref<1x128x128xf32, #tpu.memory_space<vmem>>, %arg6: memref<1x128x128xf32, #tpu.memory_space<vmem>>, %arg7: memref<1x128x128xf32, #tpu.memory_space<vmem>>, %arg8: memref<128x1xf32, #tpu.memory_space<vmem>>, %arg9: memref<128x1xf32, #tpu.memory_space<vmem>>, %arg10: memref<128x128xf32, #tpu.memory_space<vmem>>) attributes {dimension_semantics = [#tpu.dimension_semantics<parallel>, #tpu.dimension_semantics<parallel>, #tpu.dimension_semantics<arbitrary>], iteration_bounds = array<i64: 2, 1, 2>, scalar_prefetch = 0 : i64, scratch_operands = 3 : i64, tpu.core_type = #tpu.core_type<tc>, window_params = [{transform_indices = @transform_0, window_bounds = array<i64: 1, 128, 128>}, {transform_indices = @transform_1, window_bounds = array<i64: 1, 128, 128>}, {transform_indices = @transform_2, window_bounds = array<i64: 1, 128, 128>}, {transform_indices = @transform_3, window_bounds = array<i64: 1, 128, 128>}, {transform_indices = @transform_4, window_bounds = array<i64: 1, 128, 128>}]} {
    %c0_i32 = arith.constant 0 : i32
    %0 = arith.cmpi eq, %arg2, %c0_i32 : i32
    %1 = arith.extui %0 : i1 to i32
    %c0_i32_0 = arith.constant 0 : i32
    %2 = arith.cmpi ne, %1, %c0_i32_0 : i32
    scf.if %2 {
      %cst_32 = arith.constant 0xFF800000 : f32
      %45 = vector.broadcast %cst_32 : f32 to vector<128x1xf32>
      %c0_33 = arith.constant 0 : index
      %c0_34 = arith.constant 0 : index
      %46 = vector.load %arg8[%c0_33, %c0_34] : memref<128x1xf32, #tpu.memory_space<vmem>>, vector<128x1xf32>
      tpu.vector_store %arg8[%c0_33, %c0_34], %45 {strides = array<i32>} : memref<128x1xf32, #tpu.memory_space<vmem>>, vector<128x1xf32>,
      %cst_35 = arith.constant 0.000000e+00 : f32
      %47 = vector.broadcast %cst_35 : f32 to vector<128x1xf32>
      %c0_36 = arith.constant 0 : index
      %c0_37 = arith.constant 0 : index
      %48 = vector.load %arg9[%c0_36, %c0_37] : memref<128x1xf32, #tpu.memory_space<vmem>>, vector<128x1xf32>
      tpu.vector_store %arg9[%c0_36, %c0_37], %47 {strides = array<i32>} : memref<128x1xf32, #tpu.memory_space<vmem>>, vector<128x1xf32>,
      %cst_38 = arith.constant 0.000000e+00 : f32
      %49 = vector.broadcast %cst_38 : f32 to vector<128x128xf32>
      %c0_39 = arith.constant 0 : index
      %c0_40 = arith.constant 0 : index
      %50 = vector.load %arg10[%c0_39, %c0_40] : memref<128x128xf32, #tpu.memory_space<vmem>>, vector<128x128xf32>
      tpu.vector_store %arg10[%c0_39, %c0_40], %49 {strides = array<i32>} : memref<128x128xf32, #tpu.memory_space<vmem>>, vector<128x128xf32>,
    } else {
    }
    %c0 = arith.constant 0 : index
    %c0_1 = arith.constant 0 : index
    %c0_2 = arith.constant 0 : index
    %3 = vector.load %arg3[%c0, %c0_1, %c0_2] : memref<1x128x128xf32, #tpu.memory_space<vmem>>, vector<1x128x128xf32>
    %4 = vector.shape_cast %3 : vector<1x128x128xf32> to vector<128x128xf32>
    %cst = arith.constant 0.0883883461 : f32
    %5 = vector.broadcast %cst : f32 to vector<128x128xf32>
    %6 = arith.mulf %4, %5 : vector<128x128xf32>
    %c0_3 = arith.constant 0 : index
    %c0_4 = arith.constant 0 : index
    %c0_5 = arith.constant 0 : index
    %7 = vector.load %arg4[%c0_3, %c0_4, %c0_5] : memref<1x128x128xf32, #tpu.memory_space<vmem>>, vector<1x128x128xf32>
    %8 = vector.shape_cast %7 : vector<1x128x128xf32> to vector<128x128xf32>
    %cst_6 = arith.constant dense<0.000000e+00> : vector<128x128xf32>
    %9 = tpu.matmul %6, %8, %cst_6 {dimension_numbers = #tpu.dot_dimension_numbers<[1], [1], [0], [0], [0, 0, 1, 0], [], []>} : vector<128x128xf32>, vector<128x128xf32>, vector<128x128xf32> -> vector<128x128xf32>
    %c0_7 = arith.constant 0 : index
    %c0_8 = arith.constant 0 : index
    %10 = vector.load %arg8[%c0_7, %c0_8] : memref<128x1xf32, #tpu.memory_space<vmem>>, vector<128x1xf32>
    %cst_9 = arith.constant dense<0xFF800000> : vector<128xf32>
    %11 = vector.multi_reduction <maximumf>, %9, %cst_9 [1] : vector<128x128xf32> to vector<128xf32>
    %12 = vector.shape_cast %11 : vector<128xf32> to vector<128x1xf32>
    %13 = arith.maximumf %10, %12 : vector<128x1xf32>
    %14 = arith.subf %10, %13 : vector<128x1xf32>
    %15 = math.exp %14 : vector<128x1xf32>
    %16 = vector.broadcast %13 : vector<128x1xf32> to vector<128x128xf32>
    %17 = arith.subf %9, %16 : vector<128x128xf32>
    %18 = math.exp %17 : vector<128x128xf32>
    %c0_10 = arith.constant 0 : index
    %c0_11 = arith.constant 0 : index
    %19 = vector.load %arg9[%c0_10, %c0_11] : memref<128x1xf32, #tpu.memory_space<vmem>>, vector<128x1xf32>
    %20 = arith.mulf %15, %19 : vector<128x1xf32>
    %cst_12 = arith.constant dense<0.000000e+00> : vector<128xf32>
    %21 = vector.multi_reduction <add>, %18, %cst_12 [1] : vector<128x128xf32> to vector<128xf32>
    %22 = vector.shape_cast %21 : vector<128xf32> to vector<128x1xf32>
    %23 = arith.addf %20, %22 : vector<128x1xf32>
    %c0_13 = arith.constant 0 : index
    %c0_14 = arith.constant 0 : index
    %24 = vector.load %arg9[%c0_13, %c0_14] : memref<128x1xf32, #tpu.memory_space<vmem>>, vector<128x1xf32>
    tpu.vector_store %arg9[%c0_13, %c0_14], %23 {strides = array<i32>} : memref<128x1xf32, #tpu.memory_space<vmem>>, vector<128x1xf32>,
    %c0_15 = arith.constant 0 : index
    %c0_16 = arith.constant 0 : index
    %25 = vector.load %arg8[%c0_15, %c0_16] : memref<128x1xf32, #tpu.memory_space<vmem>>, vector<128x1xf32>
    tpu.vector_store %arg8[%c0_15, %c0_16], %13 {strides = array<i32>} : memref<128x1xf32, #tpu.memory_space<vmem>>, vector<128x1xf32>,
    %c0_17 = arith.constant 0 : index
    %c0_18 = arith.constant 0 : index
    %c0_19 = arith.constant 0 : index
    %26 = vector.load %arg6[%c0_17, %c0_18, %c0_19] : memref<1x128x128xf32, #tpu.memory_space<vmem>>, vector<1x128x128xf32>
    %27 = vector.shape_cast %26 : vector<1x128x128xf32> to vector<128x128xf32>
    %cst_20 = arith.constant 5.000000e-01 : f32
    %28 = vector.broadcast %cst_20 : f32 to vector<128x128xf32>
    %29 = arith.cmpf oge, %27, %28 : vector<128x128xf32>
    %cst_21 = arith.constant 2.000000e+00 : f32
    %30 = vector.broadcast %cst_21 : f32 to vector<128x128xf32>
    %31 = arith.mulf %18, %30 : vector<128x128xf32>
    %cst_22 = arith.constant 0.000000e+00 : f32
    %32 = vector.broadcast %cst_22 : f32 to vector<128x128xf32>
    %33 = arith.select %29, %31, %32 : vector<128x128xi1>, vector<128x128xf32>
    %c0_23 = arith.constant 0 : index
    %c0_24 = arith.constant 0 : index
    %34 = vector.load %arg10[%c0_23, %c0_24] : memref<128x128xf32, #tpu.memory_space<vmem>>, vector<128x128xf32>
    %35 = vector.broadcast %15 : vector<128x1xf32> to vector<128x128xf32>
    %36 = arith.mulf %35, %34 : vector<128x128xf32>
    %c0_25 = arith.constant 0 : index
    %c0_26 = arith.constant 0 : index
    %c0_27 = arith.constant 0 : index
    %37 = vector.load %arg5[%c0_25, %c0_26, %c0_27] : memref<1x128x128xf32, #tpu.memory_space<vmem>>, vector<1x128x128xf32>
    %38 = vector.shape_cast %37 : vector<1x128x128xf32> to vector<128x128xf32>
    %cst_28 = arith.constant dense<0.000000e+00> : vector<128x128xf32>
    %39 = tpu.matmul %33, %38, %cst_28 {dimension_numbers = #tpu.dot_dimension_numbers<[1], [0], [0], [1], [0, 0, 1, 1], [], []>} : vector<128x128xf32>, vector<128x128xf32>, vector<128x128xf32> -> vector<128x128xf32>
    %40 = arith.addf %36, %39 : vector<128x128xf32>
    %c0_29 = arith.constant 0 : index
    %c0_30 = arith.constant 0 : index
    %41 = vector.load %arg10[%c0_29, %c0_30] : memref<128x128xf32, #tpu.memory_space<vmem>>, vector<128x128xf32>
    tpu.vector_store %arg10[%c0_29, %c0_30], %40 {strides = array<i32>} : memref<128x128xf32, #tpu.memory_space<vmem>>, vector<128x128xf32>,
    %c1_i32 = arith.constant 1 : i32
    %42 = arith.cmpi eq, %arg2, %c1_i32 : i32
    %43 = arith.extui %42 : i1 to i32
    %c0_i32_31 = arith.constant 0 : i32
    %44 = arith.cmpi ne, %43, %c0_i32_31 : i32
    scf.if %44 {
      %c0_32 = arith.constant 0 : index
      %c0_33 = arith.constant 0 : index
      %45 = vector.load %arg10[%c0_32, %c0_33] : memref<128x128xf32, #tpu.memory_space<vmem>>, vector<128x128xf32>
      %c0_34 = arith.constant 0 : index
      %c0_35 = arith.constant 0 : index
      %46 = vector.load %arg9[%c0_34, %c0_35] : memref<128x1xf32, #tpu.memory_space<vmem>>, vector<128x1xf32>
      %47 = vector.broadcast %46 : vector<128x1xf32> to vector<128x128xf32>
      %48 = arith.divf %45, %47 : vector<128x128xf32>
      %c0_36 = arith.constant 0 : index
      %c0_37 = arith.constant 0 : index
      %c0_38 = arith.constant 0 : index
      %49 = vector.load %arg7[%c0_36, %c0_37, %c0_38] : memref<1x128x128xf32, #tpu.memory_space<vmem>>, vector<1x128x128xf32>
      %50 = vector.shape_cast %49 : vector<1x128x128xf32> to vector<128x128xf32>
      %51 = vector.shape_cast %48 : vector<128x128xf32> to vector<1x128x128xf32>
      tpu.vector_store %arg7[%c0_36, %c0_37, %c0_38], %51 {strides = array<i32>} : memref<1x128x128xf32, #tpu.memory_space<vmem>>, vector<1x128x128xf32>,
    } else {
    }
    return
  }
  func.func @transform_0(%arg0: i32, %arg1: i32, %arg2: i32) -> (i32, i32, i32) {
    %c0_i32 = arith.constant 0 : i32
    %c0_i32_0 = arith.constant 0 : i32
    return %arg0, %arg1, %c0_i32 : i32, i32, i32
  }
  func.func @transform_1(%arg0: i32, %arg1: i32, %arg2: i32) -> (i32, i32, i32) {
    %c0_i32 = arith.constant 0 : i32
    %c0_i32_0 = arith.constant 0 : i32
    return %arg0, %arg2, %c0_i32 : i32, i32, i32
  }
  func.func @transform_2(%arg0: i32, %arg1: i32, %arg2: i32) -> (i32, i32, i32) {
    %c0_i32 = arith.constant 0 : i32
    %c0_i32_0 = arith.constant 0 : i32
    return %arg0, %arg2, %c0_i32 : i32, i32, i32
  }
  func.func @transform_3(%arg0: i32, %arg1: i32, %arg2: i32) -> (i32, i32, i32) {
    %c0_i32 = arith.constant 0 : i32
    return %arg0, %arg1, %arg2 : i32, i32, i32
  }
  func.func @transform_4(%arg0: i32, %arg1: i32, %arg2: i32) -> (i32, i32, i32) {
    %c0_i32 = arith.constant 0 : i32
    %c0_i32_0 = arith.constant 0 : i32
    return %arg0, %arg1, %c0_i32 : i32, i32, i32
  }
}

</mosaic_0001>

<llo_original>
// kernel: tpu_custom_call.1
$region0: #{tpu_custom_call.1}
  #allocation0 [shape = 'u32[]', space=smem, size = 0x4, offset = 0x4, fixed_abs, tag = 'smem constant byte address 0x4 - core index']
  #allocation1 [shape = 'u32[144,128]{1,0:T(1,128)}', space=vmem, size = 0x12000, scoped, tag = 'internal scratch']
  #allocation2 [shape = 'f32[128,1]{1,0:T(8,128)}', space=vmem, size = 0x10000, scoped, tag = 'scratch operand']
  #allocation3 [shape = 'f32[128,1]{1,0:T(8,128)}', space=vmem, size = 0x10000, scoped, tag = 'scratch operand']
  #allocation4 [shape = 'f32[128,128]{1,0:T(8,128)}', space=vmem, size = 0x10000, scoped, tag = 'scratch operand']
  %s0 = inlined_call_operand.hbm [shape: f32[2,128,128], index: 0, kind: input, shape index: {}]
  %s1 = inlined_call_operand.hbm [shape: f32[2,256,128], index: 1, kind: input, shape index: {}]
  %s2 = inlined_call_operand.hbm [shape: f32[2,256,128], index: 2, kind: input, shape index: {}]
  %s3 = inlined_call_operand.hbm [shape: f32[2,128,256], index: 3, kind: input, shape index: {}]
  %s4 = inlined_call_operand.hbm [shape: f32[2,128,128], index: 4, kind: output, shape index: {}]
  %s5 = sld [smem:[#allocation0]]
  $region73: #{tpu_custom_call.1} parent=0
    _
  %s7 = ssub.s32 1, %s5
  %s8 = scalar_select 0, %s7, %s5
  $region1: #{tpu_custom_call.1} parent=0
    #allocation5 [shape = 'u8[131072]{0}', space=vmem, size = 0x20000, scoped, tag = 'input window, operand 0']
    #allocation6 [shape = 's32[2]{0}', space=sflag, size = 0x8, scoped, tag = 'scoped memory for tpu_custom_call.1']
    #allocation7 [shape = 's32[2]{0}', space=sflag, size = 0x8, scoped, tag = 'scoped memory for tpu_custom_call.1']
    #allocation8 [shape = 'u8[131072]{0}', space=vmem, size = 0x20000, scoped, tag = 'input window, operand 1']
    #allocation9 [shape = 's32[2]{0}', space=sflag, size = 0x8, scoped, tag = 'scoped memory for tpu_custom_call.1']
    #allocation10 [shape = 'u8[131072]{0}', space=vmem, size = 0x20000, scoped, tag = 'input window, operand 2']
    #allocation11 [shape = 'u8[131072]{0}', space=vmem, size = 0x20000, scoped, tag = 'input window, operand 3']
    #allocation12 [shape = 's32[2]{0}', space=sflag, size = 0x8, scoped, tag = 'scoped memory for tpu_custom_call.1']
    #allocation13 [shape = 'u8[131072]{0}', space=vmem, size = 0x20000, scoped, tag = 'output window, operand 0']
    %9 = vsyncpa [#allocation6], 0
    %s10 = scalar_lea.sflag [#allocation6], 1
    %11 = vsyncpa %s10, 0
    %12 = vsyncpa [#allocation9], 0
    %s13 = scalar_lea.sflag [#allocation9], 1
    %14 = vsyncpa %s13, 0
    %15 = vsyncpa [#allocation12], 0
    %s16 = scalar_lea.sflag [#allocation12], 1
    %17 = vsyncpa %s16, 0
    %18 = vsyncpa [#allocation7], 0
    %s19 = scalar_lea.sflag [#allocation7], 1
    %20 = vsyncpa %s19, 0
    loop: start=0, step=1, limit=6
    $region2: #{tpu_custom_call.1} parent=1 // loop_pre_header
      _
    $region3: #{tpu_custom_call.1} parent=1 // loop_header
      %s22 = sphi 0, %s26
      %p23 = scmp.ge.s32.totalorder %s22, 6
      %s29 = sphi 0, %s48
      %s30 = sphi 0, %s44
      %s31 = sphi 0, %s40
      %s32 = sphi 0, %s29
      %s33 = sphi 0, %s30
      %s34 = sphi 0, %s31
      %s35 = sphi 0, %s32
      %s36 = sphi 0, %s33
      %s37 = sphi 0, %s34
      %s53 = sphi 0, %s55
      %s56 = sphi 0, %s53
      %s57 = sphi 0, %s56
      %s73 = sphi 0, %s57
      %s81 = sphi 0, %s83
      %s84 = sphi 0, %s81
      %s85 = sphi 0, %s84
      %s101 = sphi 0, %s85
      %s109 = sphi 0, %s111
      %s112 = sphi 0, %s109
      %s113 = sphi 0, %s112
      %s129 = sphi 0, %s113
      %s139 = sphi 0, %s141
      %s142 = sphi 0, %s139
      %s143 = sphi 0, %s142
      %s159 = sphi 0, %s143
      %s167 = sphi 0, %s169
      %s170 = sphi 0, %s167
      %s171 = sphi 0, %s170
      %s187 = sphi 0, %s171
    $region4: #{tpu_custom_call.1} parent=1 // loop_header_branch
      %25 = sbr.rel (%p23) target = $region8
    $region5: #{tpu_custom_call.1} parent=1 // loop_body
      %s27 = ssub.s32 %s22, 1
      %s28 = ssub.s32 %s22, 2
      %s38 = sadd.s32 1, %s31
      %p39 = scmp.ge.s32.totalorder %s38, 2
      %s40 = scalar_select %p39, 0, %s38
      %s41 = sadd.s32 1, %s30
      %s42 = scalar_select %p39, %s41, %s30
      %p43 = scmp.ge.s32.totalorder %s42, 1
      %s44 = scalar_select %p43, 0, %s42
      %s45 = sadd.s32 1, %s29
      %s46 = scalar_select %p43, %s45, %s29
      %p47 = scmp.ge.s32.totalorder %s46, 2
      %s48 = scalar_select %p47, 0, %s46
      %s49 = ssub.s32 %s29, %s48
      %s50 = ssub.s32 %s30, %s44
      %s51 = sor.u32 %s49, %s50
      %p52 = scmp.eq.s32.totalorder %s51, 0
      %s54 = sadd.s32 %s53, 1
      %s55 = scalar_select %p52, %s53, %s54
      %p58 = pneg %p52
      %p59 = scmp.eq.s32.totalorder %s22, 3
      %p60 = por %p58, %p59
      %p61 = scmp.ne.s32.totalorder %s53, %s56
      %p62 = scmp.eq.s32.totalorder %s22, 0
      %p63 = por %p61, %p62
      %p64 = scmp.ne.s32.totalorder %s53, %s56
      %p65 = scmp.eq.s32.totalorder %s27, 3
      %p66 = por %p64, %p65
      %p67 = scmp.ne.s32.totalorder %s56, %s57
      %p68 = scmp.eq.s32.totalorder %s27, 0
      %p69 = por %p67, %p68
      %p70 = scmp.ne.s32.totalorder %s56, %s57
      %p71 = scmp.eq.s32.totalorder %s28, 3
      %p72 = por %p70, %p71
      %p74 = scmp.ne.s32.totalorder %s57, %s73
      %p75 = scmp.eq.s32.totalorder %s28, 0
      %p76 = por %p74, %p75
      %s77 = ssub.s32 %s29, %s48
      %s78 = ssub.s32 %s31, %s40
      %s79 = sor.u32 %s77, %s78
      %p80 = scmp.eq.s32.totalorder %s79, 0
      %s82 = sadd.s32 %s81, 1
      %s83 = scalar_select %p80, %s81, %s82
      %p86 = pneg %p80
      %p87 = scmp.eq.s32.totalorder %s22, 3
      %p88 = por %p86, %p87
      %p89 = scmp.ne.s32.totalorder %s81, %s84
      %p90 = scmp.eq.s32.totalorder %s22, 0
      %p91 = por %p89, %p90
      %p92 = scmp.ne.s32.totalorder %s81, %s84
      %p93 = scmp.eq.s32.totalorder %s27, 3
      %p94 = por %p92, %p93
      %p95 = scmp.ne.s32.totalorder %s84, %s85
      %p96 = scmp.eq.s32.totalorder %s27, 0
      %p97 = por %p95, %p96
      %p98 = scmp.ne.s32.totalorder %s84, %s85
      %p99 = scmp.eq.s32.totalorder %s28, 3
      %p100 = por %p98, %p99
      %p102 = scmp.ne.s32.totalorder %s85, %s101
      %p103 = scmp.eq.s32.totalorder %s28, 0
      %p104 = por %p102, %p103
      %s105 = ssub.s32 %s29, %s48
      %s106 = ssub.s32 %s31, %s40
      %s107 = sor.u32 %s105, %s106
      %p108 = scmp.eq.s32.totalorder %s107, 0
      %s110 = sadd.s32 %s109, 1
      %s111 = scalar_select %p108, %s109, %s110
      %p114 = pneg %p108
      %p115 = scmp.eq.s32.totalorder %s22, 3
      %p116 = por %p114, %p115
      %p117 = scmp.ne.s32.totalorder %s109, %s112
      %p118 = scmp.eq.s32.totalorder %s22, 0
      %p119 = por %p117, %p118
      %p120 = scmp.ne.s32.totalorder %s109, %s112
      %p121 = scmp.eq.s32.totalorder %s27, 3
      %p122 = por %p120, %p121
      %p123 = scmp.ne.s32.totalorder %s112, %s113
      %p124 = scmp.eq.s32.totalorder %s27, 0
      %p125 = por %p123, %p124
      %p126 = scmp.ne.s32.totalorder %s112, %s113
      %p127 = scmp.eq.s32.totalorder %s28, 3
      %p128 = por %p126, %p127
      %p130 = scmp.ne.s32.totalorder %s113, %s129
      %p131 = scmp.eq.s32.totalorder %s28, 0
      %p132 = por %p130, %p131
      %s133 = ssub.s32 %s29, %s48
      %s134 = ssub.s32 %s30, %s44
      %s135 = sor.u32 %s133, %s134
      %s136 = ssub.s32 %s31, %s40
      %s137 = sor.u32 %s135, %s136
      %p138 = scmp.eq.s32.totalorder %s137, 0
      %s140 = sadd.s32 %s139, 1
      %s141 = scalar_select %p138, %s139, %s140
      %p144 = pneg %p138
      %p145 = scmp.eq.s32.totalorder %s22, 3
      %p146 = por %p144, %p145
      %p147 = scmp.ne.s32.totalorder %s139, %s142
      %p148 = scmp.eq.s32.totalorder %s22, 0
      %p149 = por %p147, %p148
      %p150 = scmp.ne.s32.totalorder %s139, %s142
      %p151 = scmp.eq.s32.totalorder %s27, 3
      %p152 = por %p150, %p151
      %p153 = scmp.ne.s32.totalorder %s142, %s143
      %p154 = scmp.eq.s32.totalorder %s27, 0
      %p155 = por %p153, %p154
      %p156 = scmp.ne.s32.totalorder %s142, %s143
      %p157 = scmp.eq.s32.totalorder %s28, 3
      %p158 = por %p156, %p157
      %p160 = scmp.ne.s32.totalorder %s143, %s159
      %p161 = scmp.eq.s32.totalorder %s28, 0
      %p162 = por %p160, %p161
      %s163 = ssub.s32 %s29, %s48
      %s164 = ssub.s32 %s30, %s44
      %s165 = sor.u32 %s163, %s164
      %p166 = scmp.eq.s32.totalorder %s165, 0
      %s168 = sadd.s32 %s167, 1
      %s169 = scalar_select %p166, %s167, %s168
      %p172 = pneg %p166
      %p173 = scmp.eq.s32.totalorder %s22, 3
      %p174 = por %p172, %p173
      %p175 = scmp.ne.s32.totalorder %s167, %s170
      %p176 = scmp.eq.s32.totalorder %s22, 0
      %p177 = por %p175, %p176
      %p178 = scmp.ne.s32.totalorder %s167, %s170
      %p179 = scmp.eq.s32.totalorder %s27, 3
      %p180 = por %p178, %p179
      %p181 = scmp.ne.s32.totalorder %s170, %s171
      %p182 = scmp.eq.s32.totalorder %s27, 0
      %p183 = por %p181, %p182
      %p184 = scmp.ne.s32.totalorder %s170, %s171
      %p185 = scmp.eq.s32.totalorder %s28, 3
      %p186 = por %p184, %p185
      %p188 = scmp.ne.s32.totalorder %s171, %s187
      %p189 = scmp.eq.s32.totalorder %s28, 0
      %p190 = por %p188, %p189
      %p191 = scmp.le.s32.totalorder 1, %s22
      %p192 = scmp.lt.s32.totalorder %s22, 5
      %p193 = pnand %p191, %p192
      %p194 = pneg %p193
      // Predicated region
      $region9: #{tpu_custom_call.1} parent=5 // pred_check
        _
      $region10: #{tpu_custom_call.1} parent=5 // pred_check_branch
        %196 = sbr.rel (%p193) target = $region12
      $region11: #{tpu_custom_call.1} parent=5 // pred_region
        %s197 = ssub.s32 %s22, 1
      $region12: #{tpu_custom_call.1} parent=5 // pred_fallthru
        _
      %p198 = scmp.lt.s32.totalorder %s22, 4
      // Predicated region
      $region13: #{tpu_custom_call.1} parent=5 // pred_check
        %p199 = pneg %p198
      $region14: #{tpu_custom_call.1} parent=5 // pred_check_branch
        %201 = sbr.rel (%p199) target = $region16
      $region15: #{tpu_custom_call.1} parent=5 // pred_region
        // Predicated region
        $region17: #{tpu_custom_call.1} parent=15 // pred_check
          %p202 = pneg %p63
        $region18: #{tpu_custom_call.1} parent=15 // pred_check_branch
          %204 = sbr.rel (%p202) target = $region20
        $region19: #{tpu_custom_call.1} parent=15 // pred_region
          %s205 = sand.u32 %s53, 1
          %s206 = scalar_lea.sflag [#allocation6], %s205
          %s207 = sand.u32 %s53, 1
          %s208 = smul.addr %s207, 128
          %s209 = scalar_lea.vmem [#allocation5], %s208
          %s210 = smul.u32 16, %s30
          %s212 = ssub.s32 2048, 2048
          %213 = vsyncadd %s206, %s212
          %s214 = smul.addr %s29, 16
          %s215 = sadd.s32 %s210, %s214
          %s216 = smul.addr %s215, 128
          %s217 = scalar_lea.hbm %s0, %s216
          %s218 = sshll.u32 %s209, 4
          %s219 = int_to_ptr.vmem [resolvable:$true] %s218
          %224 = dma.hbm_to_vmem [thread:$0]  %s217, 2048, %s219, %s206, 128, 128, 8
        $region20: #{tpu_custom_call.1} parent=15 // pred_fallthru
          _
        // Predicated region
        $region21: #{tpu_custom_call.1} parent=15 // pred_check
          %p225 = pneg %p91
        $region22: #{tpu_custom_call.1} parent=15 // pred_check_branch
          %227 = sbr.rel (%p225) target = $region24
        $region23: #{tpu_custom_call.1} parent=15 // pred_region
          %s228 = sand.u32 %s22, 1
          %s229 = scalar_lea.sflag [#allocation9], %s228
          %s230 = sand.u32 %s81, 1
          %s231 = smul.addr %s230, 128
          %s232 = scalar_lea.vmem [#allocation8], %s231
          %s233 = smul.u32 16, %s31
          %s235 = ssub.s32 2048, 2048
          %236 = vsyncadd %s229, %s235
          %s237 = smul.addr %s29, 32
          %s238 = sadd.s32 %s233, %s237
          %s239 = smul.addr %s238, 128
          %s240 = scalar_lea.hbm %s1, %s239
          %s241 = sshll.u32 %s232, 4
          %s242 = int_to_ptr.vmem [resolvable:$true] %s241
          %247 = dma.hbm_to_vmem [thread:$0]  %s240, 2048, %s242, %s229, 128, 128, 8
        $region24: #{tpu_custom_call.1} parent=15 // pred_fallthru
          _
        // Predicated region
        $region25: #{tpu_custom_call.1} parent=15 // pred_check
          %p248 = pneg %p119
        $region26: #{tpu_custom_call.1} parent=15 // pred_check_branch
          %250 = sbr.rel (%p248) target = $region28
        $region27: #{tpu_custom_call.1} parent=15 // pred_region
          %s251 = sand.u32 %s22, 1
          %s252 = scalar_lea.sflag [#allocation9], %s251
          %s253 = sand.u32 %s109, 1
          %s254 = smul.addr %s253, 128
          %s255 = scalar_lea.vmem [#allocation10], %s254
          %s256 = smul.u32 16, %s31
          %s258 = ssub.s32 2048, 2048
          %259 = vsyncadd %s252, %s258
          %s260 = smul.addr %s29, 32
          %s261 = sadd.s32 %s256, %s260
          %s262 = smul.addr %s261, 128
          %s263 = scalar_lea.hbm %s2, %s262
          %s264 = sshll.u32 %s255, 4
          %s265 = int_to_ptr.vmem [resolvable:$true] %s264
          %270 = dma.hbm_to_vmem [thread:$0]  %s263, 2048, %s265, %s252, 128, 128, 8
        $region28: #{tpu_custom_call.1} parent=15 // pred_fallthru
          _
        // Predicated region
        $region29: #{tpu_custom_call.1} parent=15 // pred_check
          %p271 = pneg %p149
        $region30: #{tpu_custom_call.1} parent=15 // pred_check_branch
          %273 = sbr.rel (%p271) target = $region32
        $region31: #{tpu_custom_call.1} parent=15 // pred_region
          %s274 = sand.u32 %s139, 1
          %s275 = scalar_lea.sflag [#allocation12], %s274
          %s276 = sand.u32 %s139, 1
          %s277 = smul.addr %s276, 128
          %s278 = scalar_lea.vmem [#allocation11], %s277
          %s279 = smul.u32 16, %s30
          %s281 = ssub.s32 2048, 2048
          %282 = vsyncadd %s275, %s281
          %s283 = smul.addr %s279, 2
          %s284 = sadd.s32 %s31, %s283
          %s285 = smul.addr %s29, 32
          %s286 = sadd.s32 %s284, %s285
          %s287 = smul.addr %s286, 128
          %s288 = scalar_lea.hbm %s3, %s287
          %s289 = sshll.u32 %s278, 4
          %s290 = int_to_ptr.vmem [resolvable:$true] %s289
          %295 = dma.hbm_to_vmem [thread:$0]  %s288, 2048, %s290, %s275, 256, 128, 8
        $region32: #{tpu_custom_call.1} parent=15 // pred_fallthru
          _
      $region16: #{tpu_custom_call.1} parent=5 // pred_fallthru
        _
      %p296 = scmp.le.s32.totalorder 1, %s22
      %p297 = scmp.lt.s32.totalorder %s22, 5
      %p298 = pnand %p296, %p297
      %p299 = pneg %p298
      // Predicated region
      $region33: #{tpu_custom_call.1} parent=5 // pred_check
        _
      $region34: #{tpu_custom_call.1} parent=5 // pred_check_branch
        %301 = sbr.rel (%p298) target = $region36
      $region35: #{tpu_custom_call.1} parent=5 // pred_region
        %s302 = ssub.s32 %s22, 1
        %s303 = sand.u32 %s56, 1
        %s304 = scalar_lea.sflag [#allocation6], %s303
        %s305 = sand.u32 %s56, 1
        %s306 = smul.addr %s305, 128
        %s307 = scalar_lea.vmem [#allocation5], %s306
        // Predicated region
        $region37: #{tpu_custom_call.1} parent=35 // pred_check
          %p308 = pneg %p69
        $region38: #{tpu_custom_call.1} parent=35 // pred_check_branch
          %310 = sbr.rel (%p308) target = $region40
        $region39: #{tpu_custom_call.1} parent=35 // pred_region
          %311 = dma.done %s304, 2048
        $region40: #{tpu_custom_call.1} parent=35 // pred_fallthru
          _
        %s312 = sand.u32 %s27, 1
        %s313 = scalar_lea.sflag [#allocation9], %s312
        %s314 = sand.u32 %s84, 1
        %s315 = smul.addr %s314, 128
        %s316 = scalar_lea.vmem [#allocation8], %s315
        // Predicated region
        $region41: #{tpu_custom_call.1} parent=35 // pred_check
          %p317 = pneg %p97
        $region42: #{tpu_custom_call.1} parent=35 // pred_check_branch
          %319 = sbr.rel (%p317) target = $region44
        $region43: #{tpu_custom_call.1} parent=35 // pred_region
          %320 = dma.done %s313, 2048
        $region44: #{tpu_custom_call.1} parent=35 // pred_fallthru
          _
        %s321 = sand.u32 %s27, 1
        %s322 = scalar_lea.sflag [#allocation9], %s321
        %s323 = sand.u32 %s112, 1
        %s324 = smul.addr %s323, 128
        %s325 = scalar_lea.vmem [#allocation10], %s324
        // Predicated region
        $region45: #{tpu_custom_call.1} parent=35 // pred_check
          %p326 = pneg %p125
        $region46: #{tpu_custom_call.1} parent=35 // pred_check_branch
          %328 = sbr.rel (%p326) target = $region48
        $region47: #{tpu_custom_call.1} parent=35 // pred_region
          %329 = dma.done %s322, 2048
        $region48: #{tpu_custom_call.1} parent=35 // pred_fallthru
          _
        %s330 = sand.u32 %s142, 1
        %s331 = scalar_lea.sflag [#allocation12], %s330
        %s332 = sand.u32 %s142, 1
        %s333 = smul.addr %s332, 128
        %s334 = scalar_lea.vmem [#allocation11], %s333
        // Predicated region
        $region49: #{tpu_custom_call.1} parent=35 // pred_check
          %p335 = pneg %p155
        $region50: #{tpu_custom_call.1} parent=35 // pred_check_branch
          %337 = sbr.rel (%p335) target = $region52
        $region51: #{tpu_custom_call.1} parent=35 // pred_region
          %338 = dma.done %s331, 2048
        $region52: #{tpu_custom_call.1} parent=35 // pred_fallthru
          _
        %s339 = sand.u32 %s56, 1
        %s340 = scalar_lea.sflag [#allocation6], %s339
        %s341 = sand.u32 %s56, 1
        %s342 = smul.addr %s341, 128
        %s343 = scalar_lea.vmem [#allocation5], %s342
        %p344 = pneg %p69
        %p345 = pneg %p66
        %s346 = sand.u32 %s27, 1
        %s347 = scalar_lea.sflag [#allocation9], %s346
        %s348 = sand.u32 %s84, 1
        %s349 = smul.addr %s348, 128
        %s350 = scalar_lea.vmem [#allocation8], %s349
        %p351 = pneg %p97
        %p352 = pneg %p94
        %s353 = sand.u32 %s27, 1
        %s354 = scalar_lea.sflag [#allocation9], %s353
        %s355 = sand.u32 %s112, 1
        %s356 = smul.addr %s355, 128
        %s357 = scalar_lea.vmem [#allocation10], %s356
        %p358 = pneg %p125
        %p359 = pneg %p122
        %s360 = sand.u32 %s142, 1
        %s361 = scalar_lea.sflag [#allocation12], %s360
        %s362 = sand.u32 %s142, 1
        %s363 = smul.addr %s362, 128
        %s364 = scalar_lea.vmem [#allocation11], %s363
        %p365 = pneg %p155
        %p366 = pneg %p152
        %p367 = pneg %p183
        %p368 = pneg %p180
        %s369 = sand.u32 %s170, 1
        %s370 = scalar_lea.sflag [#allocation7], %s369
        %s371 = sand.u32 %s170, 1
        %s372 = smul.addr %s371, 128
        %s373 = scalar_lea.vmem [#allocation13], %s372
        %s374 = smul.u32 16, %s33
        %s375 = smul.u32 16, %s34
        %s376 = smul.u32 16, %s34
        %s377 = smul.u32 16, %s33
        %s378 = smul.u32 16, %s33
        %p379 = scmp.eq.s32.totalorder %s34, 0
        // Predicated region
        $region53: #{tpu_custom_call.1} parent=35 // pred_check
          %p380 = pneg %p379
        $region54: #{tpu_custom_call.1} parent=35 // pred_check_branch
          %382 = sbr.rel (%p380) target = $region56
        $region55: #{tpu_custom_call.1} parent=35 // pred_region
          %vm383 = vcmask 7168
          %384 = vst.msk [vmem:[#allocation2] sm:$0xff] %vm383, -inf
          %385 = vst.msk [vmem:[#allocation2 + $0x8] sm:$0xff] %vm383, -inf
          %386 = vst.msk [vmem:[#allocation2 + $0x10] sm:$0xff] %vm383, -inf
          %387 = vst.msk [vmem:[#allocation2 + $0x18] sm:$0xff] %vm383, -inf
          %388 = vst.msk [vmem:[#allocation2 + $0x20] sm:$0xff] %vm383, -inf
          %389 = vst.msk [vmem:[#allocation2 + $0x28] sm:$0xff] %vm383, -inf
          %390 = vst.msk [vmem:[#allocation2 + $0x30] sm:$0xff] %vm383, -inf
          %391 = vst.msk [vmem:[#allocation2 + $0x38] sm:$0xff] %vm383, -inf
          %392 = vst.msk [vmem:[#allocation2 + $0x40] sm:$0xff] %vm383, -inf
          %393 = vst.msk [vmem:[#allocation2 + $0x48] sm:$0xff] %vm383, -inf
          %394 = vst.msk [vmem:[#allocation2 + $0x50] sm:$0xff] %vm383, -inf
          %395 = vst.msk [vmem:[#allocation2 + $0x58] sm:$0xff] %vm383, -inf
          %396 = vst.msk [vmem:[#allocation2 + $0x60] sm:$0xff] %vm383, -inf
          %397 = vst.msk [vmem:[#allocation2 + $0x68] sm:$0xff] %vm383, -inf
          %398 = vst.msk [vmem:[#allocation2 + $0x70] sm:$0xff] %vm383, -inf
          %399 = vst.msk [vmem:[#allocation2 + $0x78] sm:$0xff] %vm383, -inf
          %400 = vst.msk [vmem:[#allocation3] sm:$0xff] %vm383, 0.0
          %401 = vst.msk [vmem:[#allocation3 + $0x8] sm:$0xff] %vm383, 0.0
          %402 = vst.msk [vmem:[#allocation3 + $0x10] sm:$0xff] %vm383, 0.0
          %403 = vst.msk [vmem:[#allocation3 + $0x18] sm:$0xff] %vm383, 0.0
          %404 = vst.msk [vmem:[#allocation3 + $0x20] sm:$0xff] %vm383, 0.0
          %405 = vst.msk [vmem:[#allocation3 + $0x28] sm:$0xff] %vm383, 0.0
          %406 = vst.msk [vmem:[#allocation3 + $0x30] sm:$0xff] %vm383, 0.0
          %407 = vst.msk [vmem:[#allocation3 + $0x38] sm:$0xff] %vm383, 0.0
          %408 = vst.msk [vmem:[#allocation3 + $0x40] sm:$0xff] %vm383, 0.0
          %409 = vst.msk [vmem:[#allocation3 + $0x48] sm:$0xff] %vm383, 0.0
          %410 = vst.msk [vmem:[#allocation3 + $0x50] sm:$0xff] %vm383, 0.0
          %411 = vst.msk [vmem:[#allocation3 + $0x58] sm:$0xff] %vm383, 0.0
          %412 = vst.msk [vmem:[#allocation3 + $0x60] sm:$0xff] %vm383, 0.0
          %413 = vst.msk [vmem:[#allocation3 + $0x68] sm:$0xff] %vm383, 0.0
          %414 = vst.msk [vmem:[#allocation3 + $0x70] sm:$0xff] %vm383, 0.0
          %415 = vst.msk [vmem:[#allocation3 + $0x78] sm:$0xff] %vm383, 0.0
          %416 = vst [vmem:[#allocation4] sm:$0xff] 0.0
          %417 = vst [vmem:[#allocation4 + $0x8] sm:$0xff] 0.0
          %418 = vst [vmem:[#allocation4 + $0x10] sm:$0xff] 0.0
          %419 = vst [vmem:[#allocation4 + $0x18] sm:$0xff] 0.0
          %420 = vst [vmem:[#allocation4 + $0x20] sm:$0xff] 0.0
          %421 = vst [vmem:[#allocation4 + $0x28] sm:$0xff] 0.0
          %422 = vst [vmem:[#allocation4 + $0x30] sm:$0xff] 0.0
          %423 = vst [vmem:[#allocation4 + $0x38] sm:$0xff] 0.0
          %424 = vst [vmem:[#allocation4 + $0x40] sm:$0xff] 0.0
          %425 = vst [vmem:[#allocation4 + $0x48] sm:$0xff] 0.0
          %426 = vst [vmem:[#allocation4 + $0x50] sm:$0xff] 0.0
          %427 = vst [vmem:[#allocation4 + $0x58] sm:$0xff] 0.0
          %428 = vst [vmem:[#allocation4 + $0x60] sm:$0xff] 0.0
          %429 = vst [vmem:[#allocation4 + $0x68] sm:$0xff] 0.0
          %430 = vst [vmem:[#allocation4 + $0x70] sm:$0xff] 0.0
          %431 = vst [vmem:[#allocation4 + $0x78] sm:$0xff] 0.0
        $region56: #{tpu_custom_call.1} parent=35 // pred_fallthru
          _
        %v432 = vld [vmem:[%s307] sm:$0xff]
        %v433 = vld [vmem:[%s307 + $0x8] sm:$0xff]
        %v434 = vld [vmem:[%s307 + $0x10] sm:$0xff]
        %v435 = vld [vmem:[%s307 + $0x18] sm:$0xff]
        %v436 = vld [vmem:[%s307 + $0x20] sm:$0xff]
        %v437 = vld [vmem:[%s307 + $0x28] sm:$0xff]
        %v438 = vld [vmem:[%s307 + $0x30] sm:$0xff]
        %v439 = vld [vmem:[%s307 + $0x38] sm:$0xff]
        %v440 = vld [vmem:[%s307 + $0x40] sm:$0xff]
        %v441 = vld [vmem:[%s307 + $0x48] sm:$0xff]
        %v442 = vld [vmem:[%s307 + $0x50] sm:$0xff]
        %v443 = vld [vmem:[%s307 + $0x58] sm:$0xff]
        %v444 = vld [vmem:[%s307 + $0x60] sm:$0xff]
        %v445 = vld [vmem:[%s307 + $0x68] sm:$0xff]
        %v446 = vld [vmem:[%s307 + $0x70] sm:$0xff]
        %v447 = vld [vmem:[%s307 + $0x78] sm:$0xff]
        %v448 = vmul.f32 %v432, 0.088388346
        %v449 = vmul.f32 %v433, 0.088388346
        %v450 = vmul.f32 %v434, 0.088388346
        %v451 = vmul.f32 %v435, 0.088388346
        %v452 = vmul.f32 %v436, 0.088388346
        %v453 = vmul.f32 %v437, 0.088388346
        %v454 = vmul.f32 %v438, 0.088388346
        %v455 = vmul.f32 %v439, 0.088388346
        %v456 = vmul.f32 %v440, 0.088388346
        %v457 = vmul.f32 %v441, 0.088388346
        %v458 = vmul.f32 %v442, 0.088388346
        %v459 = vmul.f32 %v443, 0.088388346
        %v460 = vmul.f32 %v444, 0.088388346
        %v461 = vmul.f32 %v445, 0.088388346
        %v462 = vmul.f32 %v446, 0.088388346
        %v463 = vmul.f32 %v447, 0.088388346
        %v464 = vld [vmem:[%s316] sm:$0xff]
        %v465 = vld [vmem:[%s316 + $0x8] sm:$0xff]
        %v466 = vld [vmem:[%s316 + $0x10] sm:$0xff]
        %v467 = vld [vmem:[%s316 + $0x18] sm:$0xff]
        %v468 = vld [vmem:[%s316 + $0x20] sm:$0xff]
        %v469 = vld [vmem:[%s316 + $0x28] sm:$0xff]
        %v470 = vld [vmem:[%s316 + $0x30] sm:$0xff]
        %v471 = vld [vmem:[%s316 + $0x38] sm:$0xff]
        %v472 = vld [vmem:[%s316 + $0x40] sm:$0xff]
        %v473 = vld [vmem:[%s316 + $0x48] sm:$0xff]
        %v474 = vld [vmem:[%s316 + $0x50] sm:$0xff]
        %v475 = vld [vmem:[%s316 + $0x58] sm:$0xff]
        %v476 = vld [vmem:[%s316 + $0x60] sm:$0xff]
        %v477 = vld [vmem:[%s316 + $0x68] sm:$0xff]
        %v478 = vld [vmem:[%s316 + $0x70] sm:$0xff]
        %v479 = vld [vmem:[%s316 + $0x78] sm:$0xff]
        %480 = vmatprep.subr.mxu0 0.0
        %481 = vmatpush1.xpose.msra.mxu0 %v479
        %482 = vmatprep.subr.mxu0 0.0
        %483 = vmatpush1.xpose.msra.mxu0 %v478
        %484 = vmatprep.subr.mxu0 0.0
        %485 = vmatpush1.xpose.msra.mxu0 %v477
        %486 = vmatprep.subr.mxu0 0.0
        %487 = vmatpush1.xpose.msra.mxu0 %v476
        %488 = vmatprep.subr.mxu0 0.0
        %489 = vmatpush1.xpose.msra.mxu0 %v475
        %490 = vmatprep.subr.mxu0 0.0
        %491 = vmatpush1.xpose.msra.mxu0 %v474
        %492 = vmatprep.subr.mxu0 0.0
        %493 = vmatpush1.xpose.msra.mxu0 %v473
        %494 = vmatprep.subr.mxu0 0.0
        %495 = vmatpush1.xpose.msra.mxu0 %v472
        %496 = vmatprep.subr.mxu0 0.0
        %497 = vmatpush1.xpose.msra.mxu0 %v471
        %498 = vmatprep.subr.mxu0 0.0
        %499 = vmatpush1.xpose.msra.mxu0 %v470
        %500 = vmatprep.subr.mxu0 0.0
        %501 = vmatpush1.xpose.msra.mxu0 %v469
        %502 = vmatprep.subr.mxu0 0.0
        %503 = vmatpush1.xpose.msra.mxu0 %v468
        %504 = vmatprep.subr.mxu0 0.0
        %505 = vmatpush1.xpose.msra.mxu0 %v467
        %506 = vmatprep.subr.mxu0 0.0
        %507 = vmatpush1.xpose.msra.mxu0 %v466
        %508 = vmatprep.subr.mxu0 0.0
        %509 = vmatpush1.xpose.msra.mxu0 %v465
        %510 = vmatprep.subr.mxu0 0.0
        %511 = vmatpush1.xpose.msra.mxu0 %v464
        %512 = vmatprep.subr.mxu0 0.0
        %513 = vmatpush2.xpose.msra.mxu0 0.0
        %514 = vmatprep.subr.mxu0 0.0
        %515 = vmatpush2.xpose.msra.mxu0 0.0
        %516 = vmatprep.subr.mxu0 0.0
        %517 = vmatpush2.xpose.msra.mxu0 0.0
        %518 = vmatprep.subr.mxu0 0.0
        %519 = vmatpush2.xpose.msra.mxu0 0.0
        %520 = vmatprep.subr.mxu0 0.0
        %521 = vmatpush2.xpose.msra.mxu0 0.0
        %522 = vmatprep.subr.mxu0 0.0
        %523 = vmatpush2.xpose.msra.mxu0 0.0
        %524 = vmatprep.subr.mxu0 0.0
        %525 = vmatpush2.xpose.msra.mxu0 0.0
        %526 = vmatprep.subr.mxu0 0.0
        %527 = vmatpush2.xpose.msra.mxu0 0.0
        %528 = vmatprep.subr.mxu0 0.0
        %529 = vmatpush2.xpose.msra.mxu0 0.0
        %530 = vmatprep.subr.mxu0 0.0
        %531 = vmatpush2.xpose.msra.mxu0 0.0
        %532 = vmatprep.subr.mxu0 0.0
        %533 = vmatpush2.xpose.msra.mxu0 0.0
        %534 = vmatprep.subr.mxu0 0.0
        %535 = vmatpush2.xpose.msra.mxu0 0.0
        %536 = vmatprep.subr.mxu0 0.0
        %537 = vmatpush2.xpose.msra.mxu0 0.0
        %538 = vmatprep.subr.mxu0 0.0
        %539 = vmatpush2.xpose.msra.mxu0 0.0
        %540 = vmatprep.subr.mxu0 0.0
        %541 = vmatpush2.xpose.msra.mxu0 0.0
        %542 = vmatprep.subr.mxu0 0.0
        %543 = vmatpush2.xpose.msra.mxu0 0.0
        %544 = vmatprep.mubr.f32.mxu0 0.0
        %545 = vmatmul.mubr.f32.gmra.mxu0 %v448
        %v546 = vpop.f32.mrf.mxu0
        %v547 = vadd.f32 0.0, %v546
        %v548 = vpop.f32.mrf.mxu0
        %549 = vmatprep.mubr.f32.mxu0 0.0
        %550 = vmatmul.mubr.f32.gmra.mxu0 %v449
        %v551 = vpop.f32.mrf.mxu0
        %v552 = vadd.f32 0.0, %v551
        %v553 = vpop.f32.mrf.mxu0
        %554 = vmatprep.mubr.f32.mxu0 0.0
        %555 = vmatmul.mubr.f32.gmra.mxu0 %v450
        %v556 = vpop.f32.mrf.mxu0
        %v557 = vadd.f32 0.0, %v556
        %v558 = vpop.f32.mrf.mxu0
        %559 = vmatprep.mubr.f32.mxu0 0.0
        %560 = vmatmul.mubr.f32.gmra.mxu0 %v451
        %v561 = vpop.f32.mrf.mxu0
        %v562 = vadd.f32 0.0, %v561
        %v563 = vpop.f32.mrf.mxu0
        %564 = vmatprep.mubr.f32.mxu0 0.0
        %565 = vmatmul.mubr.f32.gmra.mxu0 %v452
        %v566 = vpop.f32.mrf.mxu0
        %v567 = vadd.f32 0.0, %v566
        %v568 = vpop.f32.mrf.mxu0
        %569 = vmatprep.mubr.f32.mxu0 0.0
        %570 = vmatmul.mubr.f32.gmra.mxu0 %v453
        %v571 = vpop.f32.mrf.mxu0
        %v572 = vadd.f32 0.0, %v571
        %v573 = vpop.f32.mrf.mxu0
        %574 = vmatprep.mubr.f32.mxu0 0.0
        %575 = vmatmul.mubr.f32.gmra.mxu0 %v454
        %v576 = vpop.f32.mrf.mxu0
        %v577 = vadd.f32 0.0, %v576
        %v578 = vpop.f32.mrf.mxu0
        %579 = vmatprep.mubr.f32.mxu0 0.0
        %580 = vmatmul.mubr.f32.gmra.mxu0 %v455
        %v581 = vpop.f32.mrf.mxu0
        %v582 = vadd.f32 0.0, %v581
        %v583 = vpop.f32.mrf.mxu0
        %584 = vmatprep.mubr.f32.mxu0 0.0
        %585 = vmatmul.mubr.f32.gmra.mxu0 %v456
        %v586 = vpop.f32.mrf.mxu0
        %v587 = vadd.f32 0.0, %v586
        %v588 = vpop.f32.mrf.mxu0
        %589 = vmatprep.mubr.f32.mxu0 0.0
        %590 = vmatmul.mubr.f32.gmra.mxu0 %v457
        %v591 = vpop.f32.mrf.mxu0
        %v592 = vadd.f32 0.0, %v591
        %v593 = vpop.f32.mrf.mxu0
        %594 = vmatprep.mubr.f32.mxu0 0.0
        %595 = vmatmul.mubr.f32.gmra.mxu0 %v458
        %v596 = vpop.f32.mrf.mxu0
        %v597 = vadd.f32 0.0, %v596
        %v598 = vpop.f32.mrf.mxu0
        %599 = vmatprep.mubr.f32.mxu0 0.0
        %600 = vmatmul.mubr.f32.gmra.mxu0 %v459
        %v601 = vpop.f32.mrf.mxu0
        %v602 = vadd.f32 0.0, %v601
        %v603 = vpop.f32.mrf.mxu0
        %604 = vmatprep.mubr.f32.mxu0 0.0
        %605 = vmatmul.mubr.f32.gmra.mxu0 %v460
        %v606 = vpop.f32.mrf.mxu0
        %v607 = vadd.f32 0.0, %v606
        %v608 = vpop.f32.mrf.mxu0
        %609 = vmatprep.mubr.f32.mxu0 0.0
        %610 = vmatmul.mubr.f32.gmra.mxu0 %v461
        %v611 = vpop.f32.mrf.mxu0
        %v612 = vadd.f32 0.0, %v611
        %v613 = vpop.f32.mrf.mxu0
        %614 = vmatprep.mubr.f32.mxu0 0.0
        %615 = vmatmul.mubr.f32.gmra.mxu0 %v462
        %v616 = vpop.f32.mrf.mxu0
        %v617 = vadd.f32 0.0, %v616
        %v618 = vpop.f32.mrf.mxu0
        %619 = vmatprep.mubr.f32.mxu0 0.0
        %620 = vmatmul.mubr.f32.gmra.mxu0 %v463
        %v621 = vpop.f32.mrf.mxu0
        %v622 = vadd.f32 0.0, %v621
        %v623 = vpop.f32.mrf.mxu0
        %624 = vdwg.mxu0
        %v625 = vld [vmem:[#allocation2] sm:$0xff]
        %v626 = vld [vmem:[#allocation2 + $0x8] sm:$0xff]
        %v627 = vld [vmem:[#allocation2 + $0x10] sm:$0xff]
        %v628 = vld [vmem:[#allocation2 + $0x18] sm:$0xff]
        %v629 = vld [vmem:[#allocation2 + $0x20] sm:$0xff]
        %v630 = vld [vmem:[#allocation2 + $0x28] sm:$0xff]
        %v631 = vld [vmem:[#allocation2 + $0x30] sm:$0xff]
        %v632 = vld [vmem:[#allocation2 + $0x38] sm:$0xff]
        %v633 = vld [vmem:[#allocation2 + $0x40] sm:$0xff]
        %v634 = vld [vmem:[#allocation2 + $0x48] sm:$0xff]
        %v635 = vld [vmem:[#allocation2 + $0x50] sm:$0xff]
        %v636 = vld [vmem:[#allocation2 + $0x58] sm:$0xff]
        %v637 = vld [vmem:[#allocation2 + $0x60] sm:$0xff]
        %v638 = vld [vmem:[#allocation2 + $0x68] sm:$0xff]
        %v639 = vld [vmem:[#allocation2 + $0x70] sm:$0xff]
        %v640 = vld [vmem:[#allocation2 + $0x78] sm:$0xff]
        %641 = vmax.xlane.f32.xlu0 %v547
        %v642 = vpop.xlane.xlu0 %641
        %643 = vmax.xlane.f32.xlu0 %v552
        %v644 = vpop.xlane.xlu0 %643
        %645 = vmax.xlane.f32.xlu0 %v557
        %v646 = vpop.xlane.xlu0 %645
        %647 = vmax.xlane.f32.xlu0 %v562
        %v648 = vpop.xlane.xlu0 %647
        %649 = vmax.xlane.f32.xlu0 %v567
        %v650 = vpop.xlane.xlu0 %649
        %651 = vmax.xlane.f32.xlu0 %v572
        %v652 = vpop.xlane.xlu0 %651
        %653 = vmax.xlane.f32.xlu0 %v577
        %v654 = vpop.xlane.xlu0 %653
        %655 = vmax.xlane.f32.xlu0 %v582
        %v656 = vpop.xlane.xlu0 %655
        %657 = vmax.xlane.f32.xlu0 %v587
        %v658 = vpop.xlane.xlu0 %657
        %659 = vmax.xlane.f32.xlu0 %v592
        %v660 = vpop.xlane.xlu0 %659
        %661 = vmax.xlane.f32.xlu0 %v597
        %v662 = vpop.xlane.xlu0 %661
        %663 = vmax.xlane.f32.xlu0 %v602
        %v664 = vpop.xlane.xlu0 %663
        %665 = vmax.xlane.f32.xlu0 %v607
        %v666 = vpop.xlane.xlu0 %665
        %667 = vmax.xlane.f32.xlu0 %v612
        %v668 = vpop.xlane.xlu0 %667
        %669 = vmax.xlane.f32.xlu0 %v617
        %v670 = vpop.xlane.xlu0 %669
        %671 = vmax.xlane.f32.xlu0 %v622
        %v672 = vpop.xlane.xlu0 %671
        %v673 = vmax.f32 %v625, %v642
        %v674 = vmax.f32 %v626, %v644
        %v675 = vmax.f32 %v627, %v646
        %v676 = vmax.f32 %v628, %v648
        %v677 = vmax.f32 %v629, %v650
        %v678 = vmax.f32 %v630, %v652
        %v679 = vmax.f32 %v631, %v654
        %v680 = vmax.f32 %v632, %v656
        %v681 = vmax.f32 %v633, %v658
        %v682 = vmax.f32 %v634, %v660
        %v683 = vmax.f32 %v635, %v662
        %v684 = vmax.f32 %v636, %v664
        %v685 = vmax.f32 %v637, %v666
        %v686 = vmax.f32 %v638, %v668
        %v687 = vmax.f32 %v639, %v670
        %v688 = vmax.f32 %v640, %v672
        %v689 = vsub.f32 %v625, %v673
        %v690 = vsub.f32 %v626, %v674
        %v691 = vsub.f32 %v627, %v675
        %v692 = vsub.f32 %v628, %v676
        %v693 = vsub.f32 %v629, %v677
        %v694 = vsub.f32 %v630, %v678
        %v695 = vsub.f32 %v631, %v679
        %v696 = vsub.f32 %v632, %v680
        %v697 = vsub.f32 %v633, %v681
        %v698 = vsub.f32 %v634, %v682
        %v699 = vsub.f32 %v635, %v683
        %v700 = vsub.f32 %v636, %v684
        %v701 = vsub.f32 %v637, %v685
        %v702 = vsub.f32 %v638, %v686
        %v703 = vsub.f32 %v639, %v687
        %v704 = vsub.f32 %v640, %v688
        %v705 = vmul.f32 %v689, 1.442695
        %v706 = vpow.pop %v705
        %v707 = vmul.f32 %v690, 1.442695
        %v708 = vpow.pop %v707
        %v709 = vmul.f32 %v691, 1.442695
        %v710 = vpow.pop %v709
        %v711 = vmul.f32 %v692, 1.442695
        %v712 = vpow.pop %v711
        %v713 = vmul.f32 %v693, 1.442695
        %v714 = vpow.pop %v713
        %v715 = vmul.f32 %v694, 1.442695
        %v716 = vpow.pop %v715
        %v717 = vmul.f32 %v695, 1.442695
        %v718 = vpow.pop %v717
        %v719 = vmul.f32 %v696, 1.442695
        %v720 = vpow.pop %v719
        %v721 = vmul.f32 %v697, 1.442695
        %v722 = vpow.pop %v721
        %v723 = vmul.f32 %v698, 1.442695
        %v724 = vpow.pop %v723
        %v725 = vmul.f32 %v699, 1.442695
        %v726 = vpow.pop %v725
        %v727 = vmul.f32 %v700, 1.442695
        %v728 = vpow.pop %v727
        %v729 = vmul.f32 %v701, 1.442695
        %v730 = vpow.pop %v729
        %v731 = vmul.f32 %v702, 1.442695
        %v732 = vpow.pop %v731
        %v733 = vmul.f32 %v703, 1.442695
        %v734 = vpow.pop %v733
        %v735 = vmul.f32 %v704, 1.442695
        %v736 = vpow.pop %v735
        %738 = vset.pattern.permute.xlu0 0
        %739 = vperm.xlu0 %738, %v673
        %v740 = vpop.permute.xlu0 %739
        %743 = vset.pattern.permute.xlu0 0
        %744 = vperm.xlu0 %743, %v674
        %v745 = vpop.permute.xlu0 %744
        %748 = vset.pattern.permute.xlu0 0
        %749 = vperm.xlu0 %748, %v675
        %v750 = vpop.permute.xlu0 %749
        %753 = vset.pattern.permute.xlu0 0
        %754 = vperm.xlu0 %753, %v676
        %v755 = vpop.permute.xlu0 %754
        %758 = vset.pattern.permute.xlu0 0
        %759 = vperm.xlu0 %758, %v677
        %v760 = vpop.permute.xlu0 %759
        %763 = vset.pattern.permute.xlu0 0
        %764 = vperm.xlu0 %763, %v678
        %v765 = vpop.permute.xlu0 %764
        %768 = vset.pattern.permute.xlu0 0
        %769 = vperm.xlu0 %768, %v679
        %v770 = vpop.permute.xlu0 %769
        %773 = vset.pattern.permute.xlu0 0
        %774 = vperm.xlu0 %773, %v680
        %v775 = vpop.permute.xlu0 %774
        %778 = vset.pattern.permute.xlu0 0
        %779 = vperm.xlu0 %778, %v681
        %v780 = vpop.permute.xlu0 %779
        %783 = vset.pattern.permute.xlu0 0
        %784 = vperm.xlu0 %783, %v682
        %v785 = vpop.permute.xlu0 %784
        %788 = vset.pattern.permute.xlu0 0
        %789 = vperm.xlu0 %788, %v683
        %v790 = vpop.permute.xlu0 %789
        %793 = vset.pattern.permute.xlu0 0
        %794 = vperm.xlu0 %793, %v684
        %v795 = vpop.permute.xlu0 %794
        %798 = vset.pattern.permute.xlu0 0
        %799 = vperm.xlu0 %798, %v685
        %v800 = vpop.permute.xlu0 %799
        %803 = vset.pattern.permute.xlu0 0
        %804 = vperm.xlu0 %803, %v686
        %v805 = vpop.permute.xlu0 %804
        %808 = vset.pattern.permute.xlu0 0
        %809 = vperm.xlu0 %808, %v687
        %v810 = vpop.permute.xlu0 %809
        %813 = vset.pattern.permute.xlu0 0
        %814 = vperm.xlu0 %813, %v688
        %v815 = vpop.permute.xlu0 %814
        %v817 = vsub.f32 %v547, %v740
        %v818 = vsub.f32 %v552, %v745
        %v819 = vsub.f32 %v557, %v750
        %v820 = vsub.f32 %v562, %v755
        %v821 = vsub.f32 %v567, %v760
        %v822 = vsub.f32 %v572, %v765
        %v823 = vsub.f32 %v577, %v770
        %v824 = vsub.f32 %v582, %v775
        %v825 = vsub.f32 %v587, %v780
        %v826 = vsub.f32 %v592, %v785
        %v827 = vsub.f32 %v597, %v790
        %v828 = vsub.f32 %v602, %v795
        %v829 = vsub.f32 %v607, %v800
        %v830 = vsub.f32 %v612, %v805
        %v831 = vsub.f32 %v617, %v810
        %v832 = vsub.f32 %v622, %v815
        %v833 = vmul.f32 %v817, 1.442695
        %v834 = vpow.pop %v833
        %v835 = vmul.f32 %v818, 1.442695
        %v836 = vpow.pop %v835
        %v837 = vmul.f32 %v819, 1.442695
        %v838 = vpow.pop %v837
        %v839 = vmul.f32 %v820, 1.442695
        %v840 = vpow.pop %v839
        %v841 = vmul.f32 %v821, 1.442695
        %v842 = vpow.pop %v841
        %v843 = vmul.f32 %v822, 1.442695
        %v844 = vpow.pop %v843
        %v845 = vmul.f32 %v823, 1.442695
        %v846 = vpow.pop %v845
        %v847 = vmul.f32 %v824, 1.442695
        %v848 = vpow.pop %v847
        %v849 = vmul.f32 %v825, 1.442695
        %v850 = vpow.pop %v849
        %v851 = vmul.f32 %v826, 1.442695
        %v852 = vpow.pop %v851
        %v853 = vmul.f32 %v827, 1.442695
        %v854 = vpow.pop %v853
        %v855 = vmul.f32 %v828, 1.442695
        %v856 = vpow.pop %v855
        %v857 = vmul.f32 %v829, 1.442695
        %v858 = vpow.pop %v857
        %v859 = vmul.f32 %v830, 1.442695
        %v860 = vpow.pop %v859
        %v861 = vmul.f32 %v831, 1.442695
        %v862 = vpow.pop %v861
        %v863 = vmul.f32 %v832, 1.442695
        %v864 = vpow.pop %v863
        %v865 = vld [vmem:[#allocation3] sm:$0xff]
        %v866 = vld [vmem:[#allocation3 + $0x8] sm:$0xff]
        %v867 = vld [vmem:[#allocation3 + $0x10] sm:$0xff]
        %v868 = vld [vmem:[#allocation3 + $0x18] sm:$0xff]
        %v869 = vld [vmem:[#allocation3 + $0x20] sm:$0xff]
        %v870 = vld [vmem:[#allocation3 + $0x28] sm:$0xff]
        %v871 = vld [vmem:[#allocation3 + $0x30] sm:$0xff]
        %v872 = vld [vmem:[#allocation3 + $0x38] sm:$0xff]
        %v873 = vld [vmem:[#allocation3 + $0x40] sm:$0xff]
        %v874 = vld [vmem:[#allocation3 + $0x48] sm:$0xff]
        %v875 = vld [vmem:[#allocation3 + $0x50] sm:$0xff]
        %v876 = vld [vmem:[#allocation3 + $0x58] sm:$0xff]
        %v877 = vld [vmem:[#allocation3 + $0x60] sm:$0xff]
        %v878 = vld [vmem:[#allocation3 + $0x68] sm:$0xff]
        %v879 = vld [vmem:[#allocation3 + $0x70] sm:$0xff]
        %v880 = vld [vmem:[#allocation3 + $0x78] sm:$0xff]
        %v881 = vmul.f32 %v706, %v865
        %v882 = vmul.f32 %v708, %v866
        %v883 = vmul.f32 %v710, %v867
        %v884 = vmul.f32 %v712, %v868
        %v885 = vmul.f32 %v714, %v869
        %v886 = vmul.f32 %v716, %v870
        %v887 = vmul.f32 %v718, %v871
        %v888 = vmul.f32 %v720, %v872
        %v889 = vmul.f32 %v722, %v873
        %v890 = vmul.f32 %v724, %v874
        %v891 = vmul.f32 %v726, %v875
        %v892 = vmul.f32 %v728, %v876
        %v893 = vmul.f32 %v730, %v877
        %v894 = vmul.f32 %v732, %v878
        %v895 = vmul.f32 %v734, %v879
        %v896 = vmul.f32 %v736, %v880
        %897 = vadd.xlane.f32.xlu0 %v834
        %v898 = vpop.xlane.xlu0 %897
        %899 = vadd.xlane.f32.xlu0 %v836
        %v900 = vpop.xlane.xlu0 %899
        %901 = vadd.xlane.f32.xlu0 %v838
        %v902 = vpop.xlane.xlu0 %901
        %903 = vadd.xlane.f32.xlu0 %v840
        %v904 = vpop.xlane.xlu0 %903
        %905 = vadd.xlane.f32.xlu0 %v842
        %v906 = vpop.xlane.xlu0 %905
        %907 = vadd.xlane.f32.xlu0 %v844
        %v908 = vpop.xlane.xlu0 %907
        %909 = vadd.xlane.f32.xlu0 %v846
        %v910 = vpop.xlane.xlu0 %909
        %911 = vadd.xlane.f32.xlu0 %v848
        %v912 = vpop.xlane.xlu0 %911
        %913 = vadd.xlane.f32.xlu0 %v850
        %v914 = vpop.xlane.xlu0 %913
        %915 = vadd.xlane.f32.xlu0 %v852
        %v916 = vpop.xlane.xlu0 %915
        %917 = vadd.xlane.f32.xlu0 %v854
        %v918 = vpop.xlane.xlu0 %917
        %919 = vadd.xlane.f32.xlu0 %v856
        %v920 = vpop.xlane.xlu0 %919
        %921 = vadd.xlane.f32.xlu0 %v858
        %v922 = vpop.xlane.xlu0 %921
        %923 = vadd.xlane.f32.xlu0 %v860
        %v924 = vpop.xlane.xlu0 %923
        %925 = vadd.xlane.f32.xlu0 %v862
        %v926 = vpop.xlane.xlu0 %925
        %927 = vadd.xlane.f32.xlu0 %v864
        %v928 = vpop.xlane.xlu0 %927
        %v929 = vadd.f32 %v881, %v898
        %v930 = vadd.f32 %v882, %v900
        %v931 = vadd.f32 %v883, %v902
        %v932 = vadd.f32 %v884, %v904
        %v933 = vadd.f32 %v885, %v906
        %v934 = vadd.f32 %v886, %v908
        %v935 = vadd.f32 %v887, %v910
        %v936 = vadd.f32 %v888, %v912
        %v937 = vadd.f32 %v889, %v914
        %v938 = vadd.f32 %v890, %v916
        %v939 = vadd.f32 %v891, %v918
        %v940 = vadd.f32 %v892, %v920
        %v941 = vadd.f32 %v893, %v922
        %v942 = vadd.f32 %v894, %v924
        %v943 = vadd.f32 %v895, %v926
        %v944 = vadd.f32 %v896, %v928
        %vm945 = vcmask 7168
        %946 = vst.msk [vmem:[#allocation3] sm:$0xff] %vm945, %v929
        %947 = vst.msk [vmem:[#allocation3 + $0x8] sm:$0xff] %vm945, %v930
        %948 = vst.msk [vmem:[#allocation3 + $0x10] sm:$0xff] %vm945, %v931
        %949 = vst.msk [vmem:[#allocation3 + $0x18] sm:$0xff] %vm945, %v932
        %950 = vst.msk [vmem:[#allocation3 + $0x20] sm:$0xff] %vm945, %v933
        %951 = vst.msk [vmem:[#allocation3 + $0x28] sm:$0xff] %vm945, %v934
        %952 = vst.msk [vmem:[#allocation3 + $0x30] sm:$0xff] %vm945, %v935
        %953 = vst.msk [vmem:[#allocation3 + $0x38] sm:$0xff] %vm945, %v936
        %954 = vst.msk [vmem:[#allocation3 + $0x40] sm:$0xff] %vm945, %v937
        %955 = vst.msk [vmem:[#allocation3 + $0x48] sm:$0xff] %vm945, %v938
        %956 = vst.msk [vmem:[#allocation3 + $0x50] sm:$0xff] %vm945, %v939
        %957 = vst.msk [vmem:[#allocation3 + $0x58] sm:$0xff] %vm945, %v940
        %958 = vst.msk [vmem:[#allocation3 + $0x60] sm:$0xff] %vm945, %v941
        %959 = vst.msk [vmem:[#allocation3 + $0x68] sm:$0xff] %vm945, %v942
        %960 = vst.msk [vmem:[#allocation3 + $0x70] sm:$0xff] %vm945, %v943
        %961 = vst.msk [vmem:[#allocation3 + $0x78] sm:$0xff] %vm945, %v944
        %962 = vst.msk [vmem:[#allocation2] sm:$0xff] %vm945, %v673
        %963 = vst.msk [vmem:[#allocation2 + $0x8] sm:$0xff] %vm945, %v674
        %964 = vst.msk [vmem:[#allocation2 + $0x10] sm:$0xff] %vm945, %v675
        %965 = vst.msk [vmem:[#allocation2 + $0x18] sm:$0xff] %vm945, %v676
        %966 = vst.msk [vmem:[#allocation2 + $0x20] sm:$0xff] %vm945, %v677
        %967 = vst.msk [vmem:[#allocation2 + $0x28] sm:$0xff] %vm945, %v678
        %968 = vst.msk [vmem:[#allocation2 + $0x30] sm:$0xff] %vm945, %v679
        %969 = vst.msk [vmem:[#allocation2 + $0x38] sm:$0xff] %vm945, %v680
        %970 = vst.msk [vmem:[#allocation2 + $0x40] sm:$0xff] %vm945, %v681
        %971 = vst.msk [vmem:[#allocation2 + $0x48] sm:$0xff] %vm945, %v682
        %972 = vst.msk [vmem:[#allocation2 + $0x50] sm:$0xff] %vm945, %v683
        %973 = vst.msk [vmem:[#allocation2 + $0x58] sm:$0xff] %vm945, %v684
        %974 = vst.msk [vmem:[#allocation2 + $0x60] sm:$0xff] %vm945, %v685
        %975 = vst.msk [vmem:[#allocation2 + $0x68] sm:$0xff] %vm945, %v686
        %976 = vst.msk [vmem:[#allocation2 + $0x70] sm:$0xff] %vm945, %v687
        %977 = vst.msk [vmem:[#allocation2 + $0x78] sm:$0xff] %vm945, %v688
        %v978 = vld [vmem:[%s334] sm:$0xff]
        %v979 = vld [vmem:[%s334 + $0x8] sm:$0xff]
        %v980 = vld [vmem:[%s334 + $0x10] sm:$0xff]
        %v981 = vld [vmem:[%s334 + $0x18] sm:$0xff]
        %v982 = vld [vmem:[%s334 + $0x20] sm:$0xff]
        %v983 = vld [vmem:[%s334 + $0x28] sm:$0xff]
        %v984 = vld [vmem:[%s334 + $0x30] sm:$0xff]
        %v985 = vld [vmem:[%s334 + $0x38] sm:$0xff]
        %v986 = vld [vmem:[%s334 + $0x40] sm:$0xff]
        %v987 = vld [vmem:[%s334 + $0x48] sm:$0xff]
        %v988 = vld [vmem:[%s334 + $0x50] sm:$0xff]
        %v989 = vld [vmem:[%s334 + $0x58] sm:$0xff]
        %v990 = vld [vmem:[%s334 + $0x60] sm:$0xff]
        %v991 = vld [vmem:[%s334 + $0x68] sm:$0xff]
        %v992 = vld [vmem:[%s334 + $0x70] sm:$0xff]
        %v993 = vld [vmem:[%s334 + $0x78] sm:$0xff]
        %vm994 = vcmp.ge.f32.partialorder %v978, 0.5
        %vm995 = vcmp.ge.f32.partialorder %v979, 0.5
        %vm996 = vcmp.ge.f32.partialorder %v980, 0.5
        %vm997 = vcmp.ge.f32.partialorder %v981, 0.5
        %vm998 = vcmp.ge.f32.partialorder %v982, 0.5
        %vm999 = vcmp.ge.f32.partialorder %v983, 0.5
        %vm1000 = vcmp.ge.f32.partialorder %v984, 0.5
        %vm1001 = vcmp.ge.f32.partialorder %v985, 0.5
        %vm1002 = vcmp.ge.f32.partialorder %v986, 0.5
        %vm1003 = vcmp.ge.f32.partialorder %v987, 0.5
        %vm1004 = vcmp.ge.f32.partialorder %v988, 0.5
        %vm1005 = vcmp.ge.f32.partialorder %v989, 0.5
        %vm1006 = vcmp.ge.f32.partialorder %v990, 0.5
        %vm1007 = vcmp.ge.f32.partialorder %v991, 0.5
        %vm1008 = vcmp.ge.f32.partialorder %v992, 0.5
        %vm1009 = vcmp.ge.f32.partialorder %v993, 0.5
        %v1010 = vmul.f32 %v834, 2.0
        %v1011 = vmul.f32 %v836, 2.0
        %v1012 = vmul.f32 %v838, 2.0
        %v1013 = vmul.f32 %v840, 2.0
        %v1014 = vmul.f32 %v842, 2.0
        %v1015 = vmul.f32 %v844, 2.0
        %v1016 = vmul.f32 %v846, 2.0
        %v1017 = vmul.f32 %v848, 2.0
        %v1018 = vmul.f32 %v850, 2.0
        %v1019 = vmul.f32 %v852, 2.0
        %v1020 = vmul.f32 %v854, 2.0
        %v1021 = vmul.f32 %v856, 2.0
        %v1022 = vmul.f32 %v858, 2.0
        %v1023 = vmul.f32 %v860, 2.0
        %v1024 = vmul.f32 %v862, 2.0
        %v1025 = vmul.f32 %v864, 2.0
        %v1026 = vsel %vm994, %v1010, 0.0
        %v1027 = vsel %vm995, %v1011, 0.0
        %v1028 = vsel %vm996, %v1012, 0.0
        %v1029 = vsel %vm997, %v1013, 0.0
        %v1030 = vsel %vm998, %v1014, 0.0
        %v1031 = vsel %vm999, %v1015, 0.0
        %v1032 = vsel %vm1000, %v1016, 0.0
        %v1033 = vsel %vm1001, %v1017, 0.0
        %v1034 = vsel %vm1002, %v1018, 0.0
        %v1035 = vsel %vm1003, %v1019, 0.0
        %v1036 = vsel %vm1004, %v1020, 0.0
        %v1037 = vsel %vm1005, %v1021, 0.0
        %v1038 = vsel %vm1006, %v1022, 0.0
        %v1039 = vsel %vm1007, %v1023, 0.0
        %v1040 = vsel %vm1008, %v1024, 0.0
        %v1041 = vsel %vm1009, %v1025, 0.0
        %v1042 = vld [vmem:[#allocation4] sm:$0xff]
        %v1043 = vld [vmem:[#allocation4 + $0x8] sm:$0xff]
        %v1044 = vld [vmem:[#allocation4 + $0x10] sm:$0xff]
        %v1045 = vld [vmem:[#allocation4 + $0x18] sm:$0xff]
        %v1046 = vld [vmem:[#allocation4 + $0x20] sm:$0xff]
        %v1047 = vld [vmem:[#allocation4 + $0x28] sm:$0xff]
        %v1048 = vld [vmem:[#allocation4 + $0x30] sm:$0xff]
        %v1049 = vld [vmem:[#allocation4 + $0x38] sm:$0xff]
        %v1050 = vld [vmem:[#allocation4 + $0x40] sm:$0xff]
        %v1051 = vld [vmem:[#allocation4 + $0x48] sm:$0xff]
        %v1052 = vld [vmem:[#allocation4 + $0x50] sm:$0xff]
        %v1053 = vld [vmem:[#allocation4 + $0x58] sm:$0xff]
        %v1054 = vld [vmem:[#allocation4 + $0x60] sm:$0xff]
        %v1055 = vld [vmem:[#allocation4 + $0x68] sm:$0xff]
        %v1056 = vld [vmem:[#allocation4 + $0x70] sm:$0xff]
        %v1057 = vld [vmem:[#allocation4 + $0x78] sm:$0xff]
        %1059 = vset.pattern.permute.xlu0 0
        %1060 = vperm.xlu0 %1059, %v706
        %v1061 = vpop.permute.xlu0 %1060
        %1064 = vset.pattern.permute.xlu0 0
        %1065 = vperm.xlu0 %1064, %v708
        %v1066 = vpop.permute.xlu0 %1065
        %1069 = vset.pattern.permute.xlu0 0
        %1070 = vperm.xlu0 %1069, %v710
        %v1071 = vpop.permute.xlu0 %1070
        %1074 = vset.pattern.permute.xlu0 0
        %1075 = vperm.xlu0 %1074, %v712
        %v1076 = vpop.permute.xlu0 %1075
        %1079 = vset.pattern.permute.xlu0 0
        %1080 = vperm.xlu0 %1079, %v714
        %v1081 = vpop.permute.xlu0 %1080
        %1084 = vset.pattern.permute.xlu0 0
        %1085 = vperm.xlu0 %1084, %v716
        %v1086 = vpop.permute.xlu0 %1085
        %1089 = vset.pattern.permute.xlu0 0
        %1090 = vperm.xlu0 %1089, %v718
        %v1091 = vpop.permute.xlu0 %1090
        %1094 = vset.pattern.permute.xlu0 0
        %1095 = vperm.xlu0 %1094, %v720
        %v1096 = vpop.permute.xlu0 %1095
        %1099 = vset.pattern.permute.xlu0 0
        %1100 = vperm.xlu0 %1099, %v722
        %v1101 = vpop.permute.xlu0 %1100
        %1104 = vset.pattern.permute.xlu0 0
        %1105 = vperm.xlu0 %1104, %v724
        %v1106 = vpop.permute.xlu0 %1105
        %1109 = vset.pattern.permute.xlu0 0
        %1110 = vperm.xlu0 %1109, %v726
        %v1111 = vpop.permute.xlu0 %1110
        %1114 = vset.pattern.permute.xlu0 0
        %1115 = vperm.xlu0 %1114, %v728
        %v1116 = vpop.permute.xlu0 %1115
        %1119 = vset.pattern.permute.xlu0 0
        %1120 = vperm.xlu0 %1119, %v730
        %v1121 = vpop.permute.xlu0 %1120
        %1124 = vset.pattern.permute.xlu0 0
        %1125 = vperm.xlu0 %1124, %v732
        %v1126 = vpop.permute.xlu0 %1125
        %1129 = vset.pattern.permute.xlu0 0
        %1130 = vperm.xlu0 %1129, %v734
        %v1131 = vpop.permute.xlu0 %1130
        %1134 = vset.pattern.permute.xlu0 0
        %1135 = vperm.xlu0 %1134, %v736
        %v1136 = vpop.permute.xlu0 %1135
        %v1138 = vmul.f32 %v1061, %v1042
        %v1139 = vmul.f32 %v1066, %v1043
        %v1140 = vmul.f32 %v1071, %v1044
        %v1141 = vmul.f32 %v1076, %v1045
        %v1142 = vmul.f32 %v1081, %v1046
        %v1143 = vmul.f32 %v1086, %v1047
        %v1144 = vmul.f32 %v1091, %v1048
        %v1145 = vmul.f32 %v1096, %v1049
        %v1146 = vmul.f32 %v1101, %v1050
        %v1147 = vmul.f32 %v1106, %v1051
        %v1148 = vmul.f32 %v1111, %v1052
        %v1149 = vmul.f32 %v1116, %v1053
        %v1150 = vmul.f32 %v1121, %v1054
        %v1151 = vmul.f32 %v1126, %v1055
        %v1152 = vmul.f32 %v1131, %v1056
        %v1153 = vmul.f32 %v1136, %v1057
        %v1154 = vld [vmem:[%s325] sm:$0xff]
        %v1155 = vld [vmem:[%s325 + $0x8] sm:$0xff]
        %v1156 = vld [vmem:[%s325 + $0x10] sm:$0xff]
        %v1157 = vld [vmem:[%s325 + $0x18] sm:$0xff]
        %v1158 = vld [vmem:[%s325 + $0x20] sm:$0xff]
        %v1159 = vld [vmem:[%s325 + $0x28] sm:$0xff]
        %v1160 = vld [vmem:[%s325 + $0x30] sm:$0xff]
        %v1161 = vld [vmem:[%s325 + $0x38] sm:$0xff]
        %v1162 = vld [vmem:[%s325 + $0x40] sm:$0xff]
        %v1163 = vld [vmem:[%s325 + $0x48] sm:$0xff]
        %v1164 = vld [vmem:[%s325 + $0x50] sm:$0xff]
        %v1165 = vld [vmem:[%s325 + $0x58] sm:$0xff]
        %v1166 = vld [vmem:[%s325 + $0x60] sm:$0xff]
        %v1167 = vld [vmem:[%s325 + $0x68] sm:$0xff]
        %v1168 = vld [vmem:[%s325 + $0x70] sm:$0xff]
        %v1169 = vld [vmem:[%s325 + $0x78] sm:$0xff]
        %1170 = vmatprep.subr.mxu0 0.0
        %1171 = vmatpush1.msra.mxu0 %v1169
        %1172 = vmatprep.subr.mxu0 0.0
        %1173 = vmatpush1.msra.mxu0 %v1168
        %1174 = vmatprep.subr.mxu0 0.0
        %1175 = vmatpush1.msra.mxu0 %v1167
        %1176 = vmatprep.subr.mxu0 0.0
        %1177 = vmatpush1.msra.mxu0 %v1166
        %1178 = vmatprep.subr.mxu0 0.0
        %1179 = vmatpush1.msra.mxu0 %v1165
        %1180 = vmatprep.subr.mxu0 0.0
        %1181 = vmatpush1.msra.mxu0 %v1164
        %1182 = vmatprep.subr.mxu0 0.0
        %1183 = vmatpush1.msra.mxu0 %v1163
        %1184 = vmatprep.subr.mxu0 0.0
        %1185 = vmatpush1.msra.mxu0 %v1162
        %1186 = vmatprep.subr.mxu0 0.0
        %1187 = vmatpush1.msra.mxu0 %v1161
        %1188 = vmatprep.subr.mxu0 0.0
        %1189 = vmatpush1.msra.mxu0 %v1160
        %1190 = vmatprep.subr.mxu0 0.0
        %1191 = vmatpush1.msra.mxu0 %v1159
        %1192 = vmatprep.subr.mxu0 0.0
        %1193 = vmatpush1.msra.mxu0 %v1158
        %1194 = vmatprep.subr.mxu0 0.0
        %1195 = vmatpush1.msra.mxu0 %v1157
        %1196 = vmatprep.subr.mxu0 0.0
        %1197 = vmatpush1.msra.mxu0 %v1156
        %1198 = vmatprep.subr.mxu0 0.0
        %1199 = vmatpush1.msra.mxu0 %v1155
        %1200 = vmatprep.subr.mxu0 0.0
        %1201 = vmatpush1.msra.mxu0 %v1154
        %1202 = vmatprep.subr.mxu0 0.0
        %1203 = vmatpush2.msra.mxu0 0.0
        %1204 = vmatprep.subr.mxu0 0.0
        %1205 = vmatpush2.msra.mxu0 0.0
        %1206 = vmatprep.subr.mxu0 0.0
        %1207 = vmatpush2.msra.mxu0 0.0
        %1208 = vmatprep.subr.mxu0 0.0
        %1209 = vmatpush2.msra.mxu0 0.0
        %1210 = vmatprep.subr.mxu0 0.0
        %1211 = vmatpush2.msra.mxu0 0.0
        %1212 = vmatprep.subr.mxu0 0.0
        %1213 = vmatpush2.msra.mxu0 0.0
        %1214 = vmatprep.subr.mxu0 0.0
        %1215 = vmatpush2.msra.mxu0 0.0
        %1216 = vmatprep.subr.mxu0 0.0
        %1217 = vmatpush2.msra.mxu0 0.0
        %1218 = vmatprep.subr.mxu0 0.0
        %1219 = vmatpush2.msra.mxu0 0.0
        %1220 = vmatprep.subr.mxu0 0.0
        %1221 = vmatpush2.msra.mxu0 0.0
        %1222 = vmatprep.subr.mxu0 0.0
        %1223 = vmatpush2.msra.mxu0 0.0
        %1224 = vmatprep.subr.mxu0 0.0
        %1225 = vmatpush2.msra.mxu0 0.0
        %1226 = vmatprep.subr.mxu0 0.0
        %1227 = vmatpush2.msra.mxu0 0.0
        %1228 = vmatprep.subr.mxu0 0.0
        %1229 = vmatpush2.msra.mxu0 0.0
        %1230 = vmatprep.subr.mxu0 0.0
        %1231 = vmatpush2.msra.mxu0 0.0
        %1232 = vmatprep.subr.mxu0 0.0
        %1233 = vmatpush2.msra.mxu0 0.0
        %1234 = vmatprep.mubr.f32.mxu0 0.0
        %1235 = vmatmul.mubr.f32.gmra.mxu0 %v1026
        %v1236 = vpop.f32.mrf.mxu0
        %v1237 = vadd.f32 0.0, %v1236
        %v1238 = vpop.f32.mrf.mxu0
        %1239 = vmatprep.mubr.f32.mxu0 0.0
        %1240 = vmatmul.mubr.f32.gmra.mxu0 %v1027
        %v1241 = vpop.f32.mrf.mxu0
        %v1242 = vadd.f32 0.0, %v1241
        %v1243 = vpop.f32.mrf.mxu0
        %1244 = vmatprep.mubr.f32.mxu0 0.0
        %1245 = vmatmul.mubr.f32.gmra.mxu0 %v1028
        %v1246 = vpop.f32.mrf.mxu0
        %v1247 = vadd.f32 0.0, %v1246
        %v1248 = vpop.f32.mrf.mxu0
        %1249 = vmatprep.mubr.f32.mxu0 0.0
        %1250 = vmatmul.mubr.f32.gmra.mxu0 %v1029
        %v1251 = vpop.f32.mrf.mxu0
        %v1252 = vadd.f32 0.0, %v1251
        %v1253 = vpop.f32.mrf.mxu0
        %1254 = vmatprep.mubr.f32.mxu0 0.0
        %1255 = vmatmul.mubr.f32.gmra.mxu0 %v1030
        %v1256 = vpop.f32.mrf.mxu0
        %v1257 = vadd.f32 0.0, %v1256
        %v1258 = vpop.f32.mrf.mxu0
        %1259 = vmatprep.mubr.f32.mxu0 0.0
        %1260 = vmatmul.mubr.f32.gmra.mxu0 %v1031
        %v1261 = vpop.f32.mrf.mxu0
        %v1262 = vadd.f32 0.0, %v1261
        %v1263 = vpop.f32.mrf.mxu0
        %1264 = vmatprep.mubr.f32.mxu0 0.0
        %1265 = vmatmul.mubr.f32.gmra.mxu0 %v1032
        %v1266 = vpop.f32.mrf.mxu0
        %v1267 = vadd.f32 0.0, %v1266
        %v1268 = vpop.f32.mrf.mxu0
        %1269 = vmatprep.mubr.f32.mxu0 0.0
        %1270 = vmatmul.mubr.f32.gmra.mxu0 %v1033
        %v1271 = vpop.f32.mrf.mxu0
        %v1272 = vadd.f32 0.0, %v1271
        %v1273 = vpop.f32.mrf.mxu0
        %1274 = vmatprep.mubr.f32.mxu0 0.0
        %1275 = vmatmul.mubr.f32.gmra.mxu0 %v1034
        %v1276 = vpop.f32.mrf.mxu0
        %v1277 = vadd.f32 0.0, %v1276
        %v1278 = vpop.f32.mrf.mxu0
        %1279 = vmatprep.mubr.f32.mxu0 0.0
        %1280 = vmatmul.mubr.f32.gmra.mxu0 %v1035
        %v1281 = vpop.f32.mrf.mxu0
        %v1282 = vadd.f32 0.0, %v1281
        %v1283 = vpop.f32.mrf.mxu0
        %1284 = vmatprep.mubr.f32.mxu0 0.0
        %1285 = vmatmul.mubr.f32.gmra.mxu0 %v1036
        %v1286 = vpop.f32.mrf.mxu0
        %v1287 = vadd.f32 0.0, %v1286
        %v1288 = vpop.f32.mrf.mxu0
        %1289 = vmatprep.mubr.f32.mxu0 0.0
        %1290 = vmatmul.mubr.f32.gmra.mxu0 %v1037
        %v1291 = vpop.f32.mrf.mxu0
        %v1292 = vadd.f32 0.0, %v1291
        %v1293 = vpop.f32.mrf.mxu0
        %1294 = vmatprep.mubr.f32.mxu0 0.0
        %1295 = vmatmul.mubr.f32.gmra.mxu0 %v1038
        %v1296 = vpop.f32.mrf.mxu0
        %v1297 = vadd.f32 0.0, %v1296
        %v1298 = vpop.f32.mrf.mxu0
        %1299 = vmatprep.mubr.f32.mxu0 0.0
        %1300 = vmatmul.mubr.f32.gmra.mxu0 %v1039
        %v1301 = vpop.f32.mrf.mxu0
        %v1302 = vadd.f32 0.0, %v1301
        %v1303 = vpop.f32.mrf.mxu0
        %1304 = vmatprep.mubr.f32.mxu0 0.0
        %1305 = vmatmul.mubr.f32.gmra.mxu0 %v1040
        %v1306 = vpop.f32.mrf.mxu0
        %v1307 = vadd.f32 0.0, %v1306
        %v1308 = vpop.f32.mrf.mxu0
        %1309 = vmatprep.mubr.f32.mxu0 0.0
        %1310 = vmatmul.mubr.f32.gmra.mxu0 %v1041
        %v1311 = vpop.f32.mrf.mxu0
        %v1312 = vadd.f32 0.0, %v1311
        %v1313 = vpop.f32.mrf.mxu0
        %1314 = vdwg.mxu0
        %v1315 = vadd.f32 %v1138, %v1237
        %v1316 = vadd.f32 %v1139, %v1242
        %v1317 = vadd.f32 %v1140, %v1247
        %v1318 = vadd.f32 %v1141, %v1252
        %v1319 = vadd.f32 %v1142, %v1257
        %v1320 = vadd.f32 %v1143, %v1262
        %v1321 = vadd.f32 %v1144, %v1267
        %v1322 = vadd.f32 %v1145, %v1272
        %v1323 = vadd.f32 %v1146, %v1277
        %v1324 = vadd.f32 %v1147, %v1282
        %v1325 = vadd.f32 %v1148, %v1287
        %v1326 = vadd.f32 %v1149, %v1292
        %v1327 = vadd.f32 %v1150, %v1297
        %v1328 = vadd.f32 %v1151, %v1302
        %v1329 = vadd.f32 %v1152, %v1307
        %v1330 = vadd.f32 %v1153, %v1312
        %1331 = vst [vmem:[#allocation4] sm:$0xff] %v1315
        %1332 = vst [vmem:[#allocation4 + $0x8] sm:$0xff] %v1316
        %1333 = vst [vmem:[#allocation4 + $0x10] sm:$0xff] %v1317
        %1334 = vst [vmem:[#allocation4 + $0x18] sm:$0xff] %v1318
        %1335 = vst [vmem:[#allocation4 + $0x20] sm:$0xff] %v1319
        %1336 = vst [vmem:[#allocation4 + $0x28] sm:$0xff] %v1320
        %1337 = vst [vmem:[#allocation4 + $0x30] sm:$0xff] %v1321
        %1338 = vst [vmem:[#allocation4 + $0x38] sm:$0xff] %v1322
        %1339 = vst [vmem:[#allocation4 + $0x40] sm:$0xff] %v1323
        %1340 = vst [vmem:[#allocation4 + $0x48] sm:$0xff] %v1324
        %1341 = vst [vmem:[#allocation4 + $0x50] sm:$0xff] %v1325
        %1342 = vst [vmem:[#allocation4 + $0x58] sm:$0xff] %v1326
        %1343 = vst [vmem:[#allocation4 + $0x60] sm:$0xff] %v1327
        %1344 = vst [vmem:[#allocation4 + $0x68] sm:$0xff] %v1328
        %1345 = vst [vmem:[#allocation4 + $0x70] sm:$0xff] %v1329
        %1346 = vst [vmem:[#allocation4 + $0x78] sm:$0xff] %v1330
        %p1347 = scmp.eq.s32.totalorder %s34, 1
        // Predicated region
        $region57: #{tpu_custom_call.1} parent=35 // pred_check
          %p1348 = pneg %p1347
        $region58: #{tpu_custom_call.1} parent=35 // pred_check_branch
          %1350 = sbr.rel (%p1348) target = $region60
        $region59: #{tpu_custom_call.1} parent=35 // pred_region
          %v1351 = vld [vmem:[#allocation4] sm:$0xff]
          %v1352 = vld [vmem:[#allocation4 + $0x8] sm:$0xff]
          %v1353 = vld [vmem:[#allocation4 + $0x10] sm:$0xff]
          %v1354 = vld [vmem:[#allocation4 + $0x18] sm:$0xff]
          %v1355 = vld [vmem:[#allocation4 + $0x20] sm:$0xff]
          %v1356 = vld [vmem:[#allocation4 + $0x28] sm:$0xff]
          %v1357 = vld [vmem:[#allocation4 + $0x30] sm:$0xff]
          %v1358 = vld [vmem:[#allocation4 + $0x38] sm:$0xff]
          %v1359 = vld [vmem:[#allocation4 + $0x40] sm:$0xff]
          %v1360 = vld [vmem:[#allocation4 + $0x48] sm:$0xff]
          %v1361 = vld [vmem:[#allocation4 + $0x50] sm:$0xff]
          %v1362 = vld [vmem:[#allocation4 + $0x58] sm:$0xff]
          %v1363 = vld [vmem:[#allocation4 + $0x60] sm:$0xff]
          %v1364 = vld [vmem:[#allocation4 + $0x68] sm:$0xff]
          %v1365 = vld [vmem:[#allocation4 + $0x70] sm:$0xff]
          %v1366 = vld [vmem:[#allocation4 + $0x78] sm:$0xff]
          %v1367 = vld [vmem:[#allocation3] sm:$0xff]
          %v1368 = vld [vmem:[#allocation3 + $0x8] sm:$0xff]
          %v1369 = vld [vmem:[#allocation3 + $0x10] sm:$0xff]
          %v1370 = vld [vmem:[#allocation3 + $0x18] sm:$0xff]
          %v1371 = vld [vmem:[#allocation3 + $0x20] sm:$0xff]
          %v1372 = vld [vmem:[#allocation3 + $0x28] sm:$0xff]
          %v1373 = vld [vmem:[#allocation3 + $0x30] sm:$0xff]
          %v1374 = vld [vmem:[#allocation3 + $0x38] sm:$0xff]
          %v1375 = vld [vmem:[#allocation3 + $0x40] sm:$0xff]
          %v1376 = vld [vmem:[#allocation3 + $0x48] sm:$0xff]
          %v1377 = vld [vmem:[#allocation3 + $0x50] sm:$0xff]
          %v1378 = vld [vmem:[#allocation3 + $0x58] sm:$0xff]
          %v1379 = vld [vmem:[#allocation3 + $0x60] sm:$0xff]
          %v1380 = vld [vmem:[#allocation3 + $0x68] sm:$0xff]
          %v1381 = vld [vmem:[#allocation3 + $0x70] sm:$0xff]
          %v1382 = vld [vmem:[#allocation3 + $0x78] sm:$0xff]
          %1384 = vset.pattern.permute.xlu0 0
          %1385 = vperm.xlu0 %1384, %v1367
          %v1386 = vpop.permute.xlu0 %1385
          %1389 = vset.pattern.permute.xlu0 0
          %1390 = vperm.xlu0 %1389, %v1368
          %v1391 = vpop.permute.xlu0 %1390
          %1394 = vset.pattern.permute.xlu0 0
          %1395 = vperm.xlu0 %1394, %v1369
          %v1396 = vpop.permute.xlu0 %1395
          %1399 = vset.pattern.permute.xlu0 0
          %1400 = vperm.xlu0 %1399, %v1370
          %v1401 = vpop.permute.xlu0 %1400
          %1404 = vset.pattern.permute.xlu0 0
          %1405 = vperm.xlu0 %1404, %v1371
          %v1406 = vpop.permute.xlu0 %1405
          %1409 = vset.pattern.permute.xlu0 0
          %1410 = vperm.xlu0 %1409, %v1372
          %v1411 = vpop.permute.xlu0 %1410
          %1414 = vset.pattern.permute.xlu0 0
          %1415 = vperm.xlu0 %1414, %v1373
          %v1416 = vpop.permute.xlu0 %1415
          %1419 = vset.pattern.permute.xlu0 0
          %1420 = vperm.xlu0 %1419, %v1374
          %v1421 = vpop.permute.xlu0 %1420
          %1424 = vset.pattern.permute.xlu0 0
          %1425 = vperm.xlu0 %1424, %v1375
          %v1426 = vpop.permute.xlu0 %1425
          %1429 = vset.pattern.permute.xlu0 0
          %1430 = vperm.xlu0 %1429, %v1376
          %v1431 = vpop.permute.xlu0 %1430
          %1434 = vset.pattern.permute.xlu0 0
          %1435 = vperm.xlu0 %1434, %v1377
          %v1436 = vpop.permute.xlu0 %1435
          %1439 = vset.pattern.permute.xlu0 0
          %1440 = vperm.xlu0 %1439, %v1378
          %v1441 = vpop.permute.xlu0 %1440
          %1444 = vset.pattern.permute.xlu0 0
          %1445 = vperm.xlu0 %1444, %v1379
          %v1446 = vpop.permute.xlu0 %1445
          %1449 = vset.pattern.permute.xlu0 0
          %1450 = vperm.xlu0 %1449, %v1380
          %v1451 = vpop.permute.xlu0 %1450
          %1454 = vset.pattern.permute.xlu0 0
          %1455 = vperm.xlu0 %1454, %v1381
          %v1456 = vpop.permute.xlu0 %1455
          %1459 = vset.pattern.permute.xlu0 0
          %1460 = vperm.xlu0 %1459, %v1382
          %v1461 = vpop.permute.xlu0 %1460
          %v1463 = vrcp.pop %v1386
          %v1464 = vmul.f32 %v1351, %v1463
          %v1465 = vrcp.pop %v1391
          %v1466 = vmul.f32 %v1352, %v1465
          %v1467 = vrcp.pop %v1396
          %v1468 = vmul.f32 %v1353, %v1467
          %v1469 = vrcp.pop %v1401
          %v1470 = vmul.f32 %v1354, %v1469
          %v1471 = vrcp.pop %v1406
          %v1472 = vmul.f32 %v1355, %v1471
          %v1473 = vrcp.pop %v1411
          %v1474 = vmul.f32 %v1356, %v1473
          %v1475 = vrcp.pop %v1416
          %v1476 = vmul.f32 %v1357, %v1475
          %v1477 = vrcp.pop %v1421
          %v1478 = vmul.f32 %v1358, %v1477
          %v1479 = vrcp.pop %v1426
          %v1480 = vmul.f32 %v1359, %v1479
          %v1481 = vrcp.pop %v1431
          %v1482 = vmul.f32 %v1360, %v1481
          %v1483 = vrcp.pop %v1436
          %v1484 = vmul.f32 %v1361, %v1483
          %v1485 = vrcp.pop %v1441
          %v1486 = vmul.f32 %v1362, %v1485
          %v1487 = vrcp.pop %v1446
          %v1488 = vmul.f32 %v1363, %v1487
          %v1489 = vrcp.pop %v1451
          %v1490 = vmul.f32 %v1364, %v1489
          %v1491 = vrcp.pop %v1456
          %v1492 = vmul.f32 %v1365, %v1491
          %v1493 = vrcp.pop %v1461
          %v1494 = vmul.f32 %v1366, %v1493
          %1495 = vst [vmem:[%s373] sm:$0xff] %v1464
          %1496 = vst [vmem:[%s373 + $0x8] sm:$0xff] %v1466
          %1497 = vst [vmem:[%s373 + $0x10] sm:$0xff] %v1468
          %1498 = vst [vmem:[%s373 + $0x18] sm:$0xff] %v1470
          %1499 = vst [vmem:[%s373 + $0x20] sm:$0xff] %v1472
          %1500 = vst [vmem:[%s373 + $0x28] sm:$0xff] %v1474
          %1501 = vst [vmem:[%s373 + $0x30] sm:$0xff] %v1476
          %1502 = vst [vmem:[%s373 + $0x38] sm:$0xff] %v1478
          %1503 = vst [vmem:[%s373 + $0x40] sm:$0xff] %v1480
          %1504 = vst [vmem:[%s373 + $0x48] sm:$0xff] %v1482
          %1505 = vst [vmem:[%s373 + $0x50] sm:$0xff] %v1484
          %1506 = vst [vmem:[%s373 + $0x58] sm:$0xff] %v1486
          %1507 = vst [vmem:[%s373 + $0x60] sm:$0xff] %v1488
          %1508 = vst [vmem:[%s373 + $0x68] sm:$0xff] %v1490
          %1509 = vst [vmem:[%s373 + $0x70] sm:$0xff] %v1492
          %1510 = vst [vmem:[%s373 + $0x78] sm:$0xff] %v1494
        $region60: #{tpu_custom_call.1} parent=35 // pred_fallthru
          _
        %s1511 = sand.u32 %s170, 1
        %s1512 = scalar_lea.sflag [#allocation7], %s1511
        %s1513 = sand.u32 %s170, 1
        %s1514 = smul.addr %s1513, 128
        %s1515 = scalar_lea.vmem [#allocation13], %s1514
        // Predicated region
        $region61: #{tpu_custom_call.1} parent=35 // pred_check
          %p1516 = pneg %p180
        $region62: #{tpu_custom_call.1} parent=35 // pred_check_branch
          %1518 = sbr.rel (%p1516) target = $region64
        $region63: #{tpu_custom_call.1} parent=35 // pred_region
          %s1519 = smul.u32 16, %s33
          %s1521 = ssub.s32 2048, 2048
          %1522 = vsyncadd %s1512, %s1521
          %s1523 = smul.addr %s32, 16
          %s1524 = sadd.s32 %s1519, %s1523
          %s1525 = smul.addr %s1524, 128
          %s1526 = scalar_lea.hbm %s4, %s1525
          %s1527 = sshll.u32 %s1515, 4
          %s1528 = int_to_ptr.vmem [resolvable:$true] %s1527
          %1533 = dma.vmem_to_hbm [thread:$0]  %s1528, 2048, %s1526, %s1512, 128, 128, 8
        $region64: #{tpu_custom_call.1} parent=35 // pred_fallthru
          _
      $region36: #{tpu_custom_call.1} parent=5 // pred_fallthru
        _
      %p1534 = scmp.le.s32.totalorder 2, %s22
      // Predicated region
      $region65: #{tpu_custom_call.1} parent=5 // pred_check
        %p1535 = pneg %p1534
      $region66: #{tpu_custom_call.1} parent=5 // pred_check_branch
        %1537 = sbr.rel (%p1535) target = $region68
      $region67: #{tpu_custom_call.1} parent=5 // pred_region
        %s1538 = ssub.s32 %s22, 2
        // Predicated region
        $region69: #{tpu_custom_call.1} parent=67 // pred_check
          %p1539 = pneg %p186
        $region70: #{tpu_custom_call.1} parent=67 // pred_check_branch
          %1541 = sbr.rel (%p1539) target = $region72
        $region71: #{tpu_custom_call.1} parent=67 // pred_region
          %s1542 = sand.u32 %s171, 1
          %s1543 = scalar_lea.sflag [#allocation7], %s1542
          %s1544 = sand.u32 %s171, 1
          %s1545 = smul.addr %s1544, 128
          %s1546 = scalar_lea.vmem [#allocation13], %s1545
          %1547 = dma.done %s1543, 2048
        $region72: #{tpu_custom_call.1} parent=67 // pred_fallthru
          _
      $region68: #{tpu_custom_call.1} parent=5 // pred_fallthru
        _
    $region6: #{tpu_custom_call.1} parent=1 // loop_footer
      %s26 = sadd.s32 1, %s22
    $region7: #{tpu_custom_call.1} parent=1 // loop_footer_branch
      %21 = sbr.rel target = $region3
    $region8: #{tpu_custom_call.1} parent=1 // loop_exit
      _
    %1548 = vsyncpa [#allocation6], 1
    %s1549 = scalar_lea.sflag [#allocation6], 1
    %1550 = vsyncpa %s1549, 1
    %1551 = vsyncpa [#allocation9], 1
    %s1552 = scalar_lea.sflag [#allocation9], 1
    %1553 = vsyncpa %s1552, 1
    %1554 = vsyncpa [#allocation12], 1
    %s1555 = scalar_lea.sflag [#allocation12], 1
    %1556 = vsyncpa %s1555, 1
    %1557 = vsyncpa [#allocation7], 1
    %s1558 = scalar_lea.sflag [#allocation7], 1
    %1559 = vsyncpa %s1558, 1

</llo_original>
